<compile_context>
chip_gen: v6e
topology: v6e:2x2x1
jax: 0.10.0
libtpu: 0.0.40
codegen_flags: <defaults>
</compile_context>

<pallas_src>
import functools
import math

import jax
import jax.numpy as jnp
from jax import lax
from jax.experimental import pallas as pl
from jax.experimental.pallas import tpu as pltpu


def _rms(x, eps):
    return x * lax.rsqrt(jnp.mean(x * x, axis=-1, keepdims=True) + eps)


def optimus_kernel(qi_map_ref, ki_map_ref,          # scalar prefetch (SMEM)
                   x_ref, q_ref, k_ref, v_ref,      # activations
                   wout_ref, w1_ref, w23_ref,       # weights (constant blocks)
                   o_ref,                           # output
                   m_sc, l_sc, acc_sc,              # VMEM scratch
                   *, eps, compute_dtype):
    cd = compute_dtype
    H, TQ, D = acc_sc.shape
    E = x_ref.shape[2]

    t = pl.program_id(1)
    qi = qi_map_ref[t]
    ki = ki_map_ref[t]

    # ---- init (first kv tile of a query-tile group): reset softmax state ----
    @pl.when(ki == 0)
    def _init():
        m_sc[...] = jnp.full(m_sc.shape, -jnp.inf, jnp.float32)
        l_sc[...] = jnp.zeros(l_sc.shape, jnp.float32)
        acc_sc[...] = jnp.zeros(acc_sc.shape, jnp.float32)

    q = q_ref[0]                                    # (H, TQ, D), cd, pre-scaled
    k = k_ref[0]                                    # (H, TK, D), cd
    v = v_ref[0]                                    # (H, TK, D), cd
    # Scores stay f32 (softmax / mask must not drop to bf16).
    s = jnp.einsum('hqd,hkd->hqk', q, k, preferred_element_type=jnp.float32)

    def _online_softmax_update(scores):
        m_prev = m_sc[...]
        m_new = jnp.maximum(m_prev, jnp.max(scores, axis=-1, keepdims=True))
        alpha = jnp.exp(m_prev - m_new)
        p = jnp.exp(scores - m_new)
        l_sc[...] = alpha * l_sc[...] + jnp.sum(p, axis=-1, keepdims=True)
        acc_sc[...] = alpha * acc_sc[...] + jnp.einsum(
            'hqk,hkd->hqd', p.astype(cd), v, preferred_element_type=jnp.float32)
        m_sc[...] = m_new

    # ---- off-diagonal kv tiles: no causal mask, no iota/select -------------
    @pl.when(ki < qi)
    def _off_diagonal():
        _online_softmax_update(s)

    # ---- diagonal kv tile: masked update, then finalize the whole block ----
    @pl.when(ki == qi)
    def _diagonal_and_finalize():
        TK = k.shape[1]
        rows = lax.broadcasted_iota(jnp.int32, (TQ, TK), 0)
        cols = lax.broadcasted_iota(jnp.int32, (TQ, TK), 1)
        _online_softmax_update(
            jnp.where((rows >= cols)[None, :, :], s, jnp.float32(-1e30)))

        # Normalize and apply the out-projection, summing heads inside the MXU
        # accumulation over a single (TQ, E) tile (no (H, TQ, E) intermediate).
        attn3 = (acc_sc[...] * pl.reciprocal(l_sc[...], approx=True)).astype(cd)
        attn = jnp.zeros((TQ, E), jnp.float32)
        for h in range(H):                           # static, small unroll
            attn = attn + jnp.dot(attn3[h], wout_ref[h],
                                  preferred_element_type=jnp.float32)
        y = x_ref[0].astype(jnp.float32) + attn      # residual 1 (dropout = id)

        h2 = _rms(y, eps)                            # norm2 (gamma folded in W1)
        f = jnp.dot(h2.astype(cd), w1_ref[...],
                    preferred_element_type=jnp.float32)       # (TQ, 4E)
        f = jnp.dot(f.astype(cd), w23_ref[...],
                    preferred_element_type=jnp.float32)       # (TQ, E), W2@W3 fused
        f = f * jax.nn.sigmoid(f)                    # SiLU in f32
        o_ref[0] = (y + f).astype(o_ref.dtype)       # residual 2 (dropout = id)


def prepare_optimus_weights(wqkv, wout, w1, w2, w3, *, num_heads,
                            gamma1=None, gamma2=None,
                            compute_dtype=jnp.bfloat16):
    """One-time weight preparation (hoist this out of the per-step forward).

    Weights come in torch nn.Linear layout (out_features, in_features).
    RMSNorm gammas (ones at init) are folded into the following matmuls, the
    1/sqrt(D) attention scale is folded into Wq, and W2 @ W3 is pre-fused.
    """
    E = wqkv.shape[1]
    H = num_heads
    D = E // H
    if gamma1 is None:
        gamma1 = jnp.ones((E,), jnp.float32)
    if gamma2 is None:
        gamma2 = jnp.ones((E,), jnp.float32)
    scale = 1.0 / math.sqrt(D)

    # torch qkv output columns are ordered j = h*3D + t*D + d, t in {q, k, v}.
    wqkv_t = wqkv.T * gamma1[:, None]                          # (E, 3E)
    w4 = wqkv_t.reshape(E, H, 3, D)
    w4 = w4.at[:, :, 0, :].multiply(scale)                     # fold scale into Wq
    wqkv3 = jnp.transpose(w4, (1, 0, 2, 3)).reshape(H, E, 3 * D)   # (H, E, 3D)
    wout3 = wout.T.reshape(H, D, E)                            # (H, D, E)
    w1_t = w1.T * gamma2[:, None]                              # (E, 4E)
    w23 = jnp.dot(w2.T, w3.T, precision=lax.Precision.HIGHEST)  # (4E, E)

    cd = compute_dtype
    return {
        'wqkv3': wqkv3.astype(cd),
        'wout3': wout3.astype(cd),
        'w1': w1_t.astype(cd),
        'w23': w23.astype(cd),
    }


def optimus_layer(x, params, *, num_heads, eps=1e-5, q_tile=256):
    """Fused Optimuslayer forward.  x: (B, S, E) float32."""
    B, S, E = x.shape
    H = num_heads
    D = E // H
    F4 = 4 * E
    cd = params['wqkv3'].dtype

    TQ = min(q_tile, S)
    assert S % TQ == 0, "sequence length must be divisible by the query tile"
    nq = S // TQ

    # RMSNorm1 + Q/K/V projection: one wide lane-dense matmul, done ONCE, so
    # the kernel streams K/V tiles (keyed only on ki) and never re-projects.
    h1 = _rms(x.astype(jnp.float32), eps).astype(cd)
    qkv = jnp.einsum('bse,hef->bhsf', h1, params['wqkv3'],
                     preferred_element_type=jnp.float32,
                     precision=lax.Precision.HIGHEST)
    q, k, v = jnp.split(qkv.astype(cd), 3, axis=-1)            # (B, H, S, D) each

    # Flattened causal schedule: only the nq*(nq+1)/2 (qi, ki) pairs with
    # ki <= qi are ever visited (no wasted pipeline steps).
    pairs = [(qi, ki) for qi in range(nq) for ki in range(qi + 1)]
    qi_map = jnp.asarray([p[0] for p in pairs], jnp.int32)
    ki_map = jnp.asarray([p[1] for p in pairs], jnp.int32)
    n_steps = len(pairs)

    kernel = functools.partial(optimus_kernel, eps=eps, compute_dtype=cd)
    grid_spec = pltpu.PrefetchScalarGridSpec(
        num_scalar_prefetch=2,
        grid=(B, n_steps),
        in_specs=[
            pl.BlockSpec((1, TQ, E), lambda b, t, qm, km: (b, qm[t], 0)),        # x
            pl.BlockSpec((1, H, TQ, D), lambda b, t, qm, km: (b, 0, qm[t], 0)),  # q
            pl.BlockSpec((1, H, TQ, D), lambda b, t, qm, km: (b, 0, km[t], 0)),  # k
            pl.BlockSpec((1, H, TQ, D), lambda b, t, qm, km: (b, 0, km[t], 0)),  # v
            pl.BlockSpec((H, D, E), lambda b, t, qm, km: (0, 0, 0)),             # Wout
            pl.BlockSpec((E, F4), lambda b, t, qm, km: (0, 0)),                  # W1
            pl.BlockSpec((F4, E), lambda b, t, qm, km: (0, 0)),                  # W2@W3
        ],
        out_specs=pl.BlockSpec((1, TQ, E), lambda b, t, qm, km: (b, qm[t], 0)),
        scratch_shapes=[
            pltpu.VMEM((H, TQ, 1), jnp.float32),   # running max
            pltpu.VMEM((H, TQ, 1), jnp.float32),   # running sum
            pltpu.VMEM((H, TQ, D), jnp.float32),   # output accumulator
        ],
    )
    return pl.pallas_call(
        kernel,
        out_shape=jax.ShapeDtypeStruct((B, S, E), x.dtype),
        grid_spec=grid_spec,
        compiler_params=pltpu.CompilerParams(
            dimension_semantics=("parallel", "arbitrary"),
            # Leave headroom against v7x's 64 MiB physical VMEM; fine on v5e/v6e.
            vmem_limit_bytes=48 * 1024 * 1024,
        ),
    )(qi_map, ki_map, x, q, k, v, params['wout3'], params['w1'], params['w23'])


def reference(x, wqkv, wout, w1, w2, w3, num_heads, eps=1e-5):
    """Pure-JAX mirror of the PyTorch forward (torch weight layout)."""
    B, S, E = x.shape
    D = E // num_heads
    hp = lax.Precision.HIGHEST

    def rms(z):
        return z * lax.rsqrt(jnp.mean(z * z, -1, keepdims=True) + eps)

    h = rms(x)
    qkv = jnp.dot(h, wqkv.T, precision=hp)
    qkv = qkv.reshape(B, S, num_heads, 3 * D).transpose(0, 2, 1, 3)
    q, k, v = jnp.split(qkv, 3, axis=-1)
    s = jnp.einsum('bhqd,bhkd->bhqk', q, k, precision=hp) / jnp.sqrt(jnp.float32(D))
    mask = jnp.tril(jnp.ones((S, S), bool))
    s = jnp.where(mask, s, jnp.float32(-1e30))
    p = jax.nn.softmax(s, axis=-1)
    o = jnp.einsum('bhqk,bhkd->bhqd', p, v,
                   precision=hp).transpose(0, 2, 1, 3).reshape(B, S, E)
    x = x + jnp.dot(o, wout.T, precision=hp)
    h2 = rms(x)
    f = jnp.dot(jnp.dot(jnp.dot(h2, w1.T, precision=hp), w2.T, precision=hp),
                w3.T, precision=hp)
    f = f * jax.nn.sigmoid(f)
    return x + f


if __name__ == "__main__":
    def make_inputs(seed, B, S, E):
        key = jax.random.PRNGKey(seed)
        kx, k0, k1, k2, k3, k4 = jax.random.split(key, 6)
        x = jax.random.normal(kx, (B, S, E), jnp.float32)
        initrange = 0.1
        u = lambda kk, shape: jax.random.uniform(kk, shape, jnp.float32,
                                                 -initrange, initrange)
        wqkv = u(k0, (3 * E, E))    # attn.qkv_proj.weight   (out, in)
        wout = u(k1, (E, E))        # attn.out_proj.weight
        w1 = u(k2, (4 * E, E))      # feedfw[0].weight
        w2 = u(k3, (E, 4 * E))      # feedfw[1].weight
        w3 = u(k4, (E, E))          # feedfw[2].weight
        return x, wqkv, wout, w1, w2, w3

    cases = [
        # (B, S,   E,   H, q_tile, compute_dtype, atol)
        (2, 8,   32,  4, 8,   jnp.float32,  2e-2),   # module's toy shapes
        (2, 256, 128, 4, 64,  jnp.float32,  2e-2),   # 4 query tiles: flattened causal grid
        (2, 256, 128, 4, 128, jnp.bfloat16, 2e-1),   # bf16 MXU operands, f32 accum
    ]
    for B, S, E, H, tq, cd, atol in cases:
        x, wqkv, wout, w1, w2, w3 = make_inputs(0, B, S, E)
        params = prepare_optimus_weights(wqkv, wout, w1, w2, w3, num_heads=H,
                                         compute_dtype=cd)
        out = optimus_layer(x, params, num_heads=H, q_tile=tq)
        out = jax.block_until_ready(out)
        ref = reference(x, wqkv, wout, w1, w2, w3, H)
        assert out.shape == (B, S, E)
        err = float(jnp.max(jnp.abs(out - ref)))
        assert err < atol, (
            f"mismatch vs reference: max_abs_err={err} "
            f"(B={B}, S={S}, E={E}, H={H}, dtype={cd})")
    print("KERNEL_OK")
</pallas_src>

<mosaic_0001>
module attributes {stable_mosaic.version = 11 : i64} {
  func.func @optimus_kernel(%arg0: i32, %arg1: i32, %arg2: memref<1xi32, #tpu.memory_space<smem>>, %arg3: memref<1xi32, #tpu.memory_space<smem>>, %arg4: memref<1x8x32xf32, #tpu.memory_space<vmem>>, %arg5: memref<1x4x8x8xf32, #tpu.memory_space<vmem>>, %arg6: memref<1x4x8x8xf32, #tpu.memory_space<vmem>>, %arg7: memref<1x4x8x8xf32, #tpu.memory_space<vmem>>, %arg8: memref<4x8x32xf32, #tpu.memory_space<vmem>>, %arg9: memref<32x128xf32, #tpu.memory_space<vmem>>, %arg10: memref<128x32xf32, #tpu.memory_space<vmem>>, %arg11: memref<1x8x32xf32, #tpu.memory_space<vmem>>, %arg12: memref<4x8x1xf32, #tpu.memory_space<vmem>>, %arg13: memref<4x8x1xf32, #tpu.memory_space<vmem>>, %arg14: memref<4x8x8xf32, #tpu.memory_space<vmem>>) attributes {dimension_semantics = [#tpu.dimension_semantics<parallel>, #tpu.dimension_semantics<arbitrary>], iteration_bounds = array<i64: 2, 1>, scalar_prefetch = 2 : i64, scratch_operands = 3 : i64, tpu.core_type = #tpu.core_type<tc>, window_params = [{transform_indices = @transform_0, window_bounds = array<i64: 1, 8, 32>}, {transform_indices = @transform_1, window_bounds = array<i64: 1, 4, 8, 8>}, {transform_indices = @transform_2, window_bounds = array<i64: 1, 4, 8, 8>}, {transform_indices = @transform_3, window_bounds = array<i64: 1, 4, 8, 8>}, {pipeline_mode = #tpu.pipeline_mode<synchronous>, transform_indices = @transform_4, window_bounds = array<i64: 4, 8, 32>}, {pipeline_mode = #tpu.pipeline_mode<synchronous>, transform_indices = @transform_5, window_bounds = array<i64: 32, 128>}, {pipeline_mode = #tpu.pipeline_mode<synchronous>, transform_indices = @transform_6, window_bounds = array<i64: 128, 32>}, {transform_indices = @transform_7, window_bounds = array<i64: 1, 8, 32>}]} {
    %0 = arith.index_cast %arg1 : i32 to index
    %1 = memref.load %arg2[%0] : memref<1xi32, #tpu.memory_space<smem>>
    %2 = arith.index_cast %arg1 : i32 to index
    %3 = memref.load %arg3[%2] : memref<1xi32, #tpu.memory_space<smem>>
    %c0_i32 = arith.constant 0 : i32
    %4 = arith.cmpi eq, %3, %c0_i32 : i32
    %5 = arith.extui %4 : i1 to i32
    %c0_i32_0 = arith.constant 0 : i32
    %6 = arith.cmpi ne, %5, %c0_i32_0 : i32
    scf.if %6 {
      %cst_14 = arith.constant 0xFF800000 : f32
      %20 = vector.broadcast %cst_14 : f32 to vector<4x8x1xf32>
      %c0_15 = arith.constant 0 : index
      %c0_16 = arith.constant 0 : index
      %c0_17 = arith.constant 0 : index
      %21 = vector.load %arg12[%c0_15, %c0_16, %c0_17] : memref<4x8x1xf32, #tpu.memory_space<vmem>>, vector<4x8x1xf32>
      tpu.vector_store %arg12[%c0_15, %c0_16, %c0_17], %20 {strides = array<i32>} : memref<4x8x1xf32, #tpu.memory_space<vmem>>, vector<4x8x1xf32>,
      %cst_18 = arith.constant 0.000000e+00 : f32
      %22 = vector.broadcast %cst_18 : f32 to vector<4x8x1xf32>
      %c0_19 = arith.constant 0 : index
      %c0_20 = arith.constant 0 : index
      %c0_21 = arith.constant 0 : index
      %23 = vector.load %arg13[%c0_19, %c0_20, %c0_21] : memref<4x8x1xf32, #tpu.memory_space<vmem>>, vector<4x8x1xf32>
      tpu.vector_store %arg13[%c0_19, %c0_20, %c0_21], %22 {strides = array<i32>} : memref<4x8x1xf32, #tpu.memory_space<vmem>>, vector<4x8x1xf32>,
      %cst_22 = arith.constant 0.000000e+00 : f32
      %24 = vector.broadcast %cst_22 : f32 to vector<4x8x8xf32>
      %c0_23 = arith.constant 0 : index
      %c0_24 = arith.constant 0 : index
      %c0_25 = arith.constant 0 : index
      %25 = vector.load %arg14[%c0_23, %c0_24, %c0_25] : memref<4x8x8xf32, #tpu.memory_space<vmem>>, vector<4x8x8xf32>
      tpu.vector_store %arg14[%c0_23, %c0_24, %c0_25], %24 {strides = array<i32>} : memref<4x8x8xf32, #tpu.memory_space<vmem>>, vector<4x8x8xf32>,
    } else {
    }
    %c0 = arith.constant 0 : index
    %c0_1 = arith.constant 0 : index
    %c0_2 = arith.constant 0 : index
    %c0_3 = arith.constant 0 : index
    %7 = vector.load %arg5[%c0, %c0_1, %c0_2, %c0_3] : memref<1x4x8x8xf32, #tpu.memory_space<vmem>>, vector<1x4x8x8xf32>
    %8 = vector.shape_cast %7 : vector<1x4x8x8xf32> to vector<4x8x8xf32>
    %c0_4 = arith.constant 0 : index
    %c0_5 = arith.constant 0 : index
    %c0_6 = arith.constant 0 : index
    %c0_7 = arith.constant 0 : index
    %9 = vector.load %arg6[%c0_4, %c0_5, %c0_6, %c0_7] : memref<1x4x8x8xf32, #tpu.memory_space<vmem>>, vector<1x4x8x8xf32>
    %10 = vector.shape_cast %9 : vector<1x4x8x8xf32> to vector<4x8x8xf32>
    %c0_8 = arith.constant 0 : index
    %c0_9 = arith.constant 0 : index
    %c0_10 = arith.constant 0 : index
    %c0_11 = arith.constant 0 : index
    %11 = vector.load %arg7[%c0_8, %c0_9, %c0_10, %c0_11] : memref<1x4x8x8xf32, #tpu.memory_space<vmem>>, vector<1x4x8x8xf32>
    %12 = vector.shape_cast %11 : vector<1x4x8x8xf32> to vector<4x8x8xf32>
    "tpu.trace_start"() <{level = 10 : i32, message = "hqd,hkd->hqk"}> : () -> ()
    %cst = arith.constant dense<0.000000e+00> : vector<4x8x8xf32>
    %13 = tpu.matmul %8, %10, %cst {dimension_numbers = #tpu.dot_dimension_numbers<[2], [2], [1], [1], [0, 0, 0, 1, 1, 1], [0], [0]>} : vector<4x8x8xf32>, vector<4x8x8xf32>, vector<4x8x8xf32> -> vector<4x8x8xf32>
    "tpu.trace_stop"() : () -> ()
    %14 = arith.cmpi slt, %3, %1 : i32
    %15 = arith.extui %14 : i1 to i32
    %c0_i32_12 = arith.constant 0 : i32
    %16 = arith.cmpi ne, %15, %c0_i32_12 : i32
    scf.if %16 {
      %c0_14 = arith.constant 0 : index
      %c0_15 = arith.constant 0 : index
      %c0_16 = arith.constant 0 : index
      %20 = vector.load %arg12[%c0_14, %c0_15, %c0_16] : memref<4x8x1xf32, #tpu.memory_space<vmem>>, vector<4x8x1xf32>
      %cst_17 = arith.constant dense<0xFF800000> : vector<4x8xf32>
      %21 = vector.multi_reduction <maximumf>, %13, %cst_17 [2] : vector<4x8x8xf32> to vector<4x8xf32>
      %22 = vector.shape_cast %21 : vector<4x8xf32> to vector<4x8x1xf32>
      %23 = arith.maximumf %20, %22 : vector<4x8x1xf32>
      %24 = arith.subf %20, %23 : vector<4x8x1xf32>
      %25 = math.exp %24 : vector<4x8x1xf32>
      %26 = vector.broadcast %23 : vector<4x8x1xf32> to vector<4x8x8xf32>
      %27 = arith.subf %13, %26 : vector<4x8x8xf32>
      %28 = math.exp %27 : vector<4x8x8xf32>
      %c0_18 = arith.constant 0 : index
      %c0_19 = arith.constant 0 : index
      %c0_20 = arith.constant 0 : index
      %29 = vector.load %arg13[%c0_18, %c0_19, %c0_20] : memref<4x8x1xf32, #tpu.memory_space<vmem>>, vector<4x8x1xf32>
      %30 = arith.mulf %25, %29 : vector<4x8x1xf32>
      %cst_21 = arith.constant dense<0.000000e+00> : vector<4x8xf32>
      %31 = vector.multi_reduction <add>, %28, %cst_21 [2] : vector<4x8x8xf32> to vector<4x8xf32>
      %32 = vector.shape_cast %31 : vector<4x8xf32> to vector<4x8x1xf32>
      %33 = arith.addf %30, %32 : vector<4x8x1xf32>
      %c0_22 = arith.constant 0 : index
      %c0_23 = arith.constant 0 : index
      %c0_24 = arith.constant 0 : index
      %34 = vector.load %arg13[%c0_22, %c0_23, %c0_24] : memref<4x8x1xf32, #tpu.memory_space<vmem>>, vector<4x8x1xf32>
      tpu.vector_store %arg13[%c0_22, %c0_23, %c0_24], %33 {strides = array<i32>} : memref<4x8x1xf32, #tpu.memory_space<vmem>>, vector<4x8x1xf32>,
      %c0_25 = arith.constant 0 : index
      %c0_26 = arith.constant 0 : index
      %c0_27 = arith.constant 0 : index
      %35 = vector.load %arg14[%c0_25, %c0_26, %c0_27] : memref<4x8x8xf32, #tpu.memory_space<vmem>>, vector<4x8x8xf32>
      %36 = vector.broadcast %25 : vector<4x8x1xf32> to vector<4x8x8xf32>
      %37 = arith.mulf %36, %35 : vector<4x8x8xf32>
      "tpu.trace_start"() <{level = 10 : i32, message = "hqk,hkd->hqd"}> : () -> ()
      %cst_28 = arith.constant dense<0.000000e+00> : vector<4x8x8xf32>
      %38 = tpu.matmul %28, %12, %cst_28 {dimension_numbers = #tpu.dot_dimension_numbers<[2], [1], [1], [2], [0, 0, 0, 1, 1, 2], [0], [0]>} : vector<4x8x8xf32>, vector<4x8x8xf32>, vector<4x8x8xf32> -> vector<4x8x8xf32>
      "tpu.trace_stop"() : () -> ()
      %39 = arith.addf %37, %38 : vector<4x8x8xf32>
      %c0_29 = arith.constant 0 : index
      %c0_30 = arith.constant 0 : index
      %c0_31 = arith.constant 0 : index
      %40 = vector.load %arg14[%c0_29, %c0_30, %c0_31] : memref<4x8x8xf32, #tpu.memory_space<vmem>>, vector<4x8x8xf32>
      tpu.vector_store %arg14[%c0_29, %c0_30, %c0_31], %39 {strides = array<i32>} : memref<4x8x8xf32, #tpu.memory_space<vmem>>, vector<4x8x8xf32>,
      %c0_32 = arith.constant 0 : index
      %c0_33 = arith.constant 0 : index
      %c0_34 = arith.constant 0 : index
      %41 = vector.load %arg12[%c0_32, %c0_33, %c0_34] : memref<4x8x1xf32, #tpu.memory_space<vmem>>, vector<4x8x1xf32>
      tpu.vector_store %arg12[%c0_32, %c0_33, %c0_34], %23 {strides = array<i32>} : memref<4x8x1xf32, #tpu.memory_space<vmem>>, vector<4x8x1xf32>,
    } else {
    }
    %17 = arith.cmpi eq, %3, %1 : i32
    %18 = arith.extui %17 : i1 to i32
    %c0_i32_13 = arith.constant 0 : i32
    %19 = arith.cmpi ne, %18, %c0_i32_13 : i32
    scf.if %19 {
      %20 = tpu.iota {dimensions = array<i32: 0>} : vector<8x8xi32>
      %21 = tpu.iota {dimensions = array<i32: 1>} : vector<8x8xi32>
      %22 = arith.cmpi sge, %20, %21 : vector<8x8xi32>
      %23 = vector.shape_cast %22 : vector<8x8xi1> to vector<1x8x8xi1>
      %cst_14 = arith.constant -1.000000e+30 : f32
      %24 = vector.shape_cast %23 : vector<1x8x8xi1> to vector<1x8x8xi1>
      %25 = vector.broadcast %24 : vector<1x8x8xi1> to vector<4x8x8xi1>
      %26 = vector.broadcast %cst_14 : f32 to vector<4x8x8xf32>
      %27 = arith.select %25, %13, %26 : vector<4x8x8xi1>, vector<4x8x8xf32>
      %c0_15 = arith.constant 0 : index
      %c0_16 = arith.constant 0 : index
      %c0_17 = arith.constant 0 : index
      %28 = vector.load %arg12[%c0_15, %c0_16, %c0_17] : memref<4x8x1xf32, #tpu.memory_space<vmem>>, vector<4x8x1xf32>
      %cst_18 = arith.constant dense<0xFF800000> : vector<4x8xf32>
      %29 = vector.multi_reduction <maximumf>, %27, %cst_18 [2] : vector<4x8x8xf32> to vector<4x8xf32>
      %30 = vector.shape_cast %29 : vector<4x8xf32> to vector<4x8x1xf32>
      %31 = arith.maximumf %28, %30 : vector<4x8x1xf32>
      %32 = arith.subf %28, %31 : vector<4x8x1xf32>
      %33 = math.exp %32 : vector<4x8x1xf32>
      %34 = vector.broadcast %31 : vector<4x8x1xf32> to vector<4x8x8xf32>
      %35 = arith.subf %27, %34 : vector<4x8x8xf32>
      %36 = math.exp %35 : vector<4x8x8xf32>
      %c0_19 = arith.constant 0 : index
      %c0_20 = arith.constant 0 : index
      %c0_21 = arith.constant 0 : index
      %37 = vector.load %arg13[%c0_19, %c0_20, %c0_21] : memref<4x8x1xf32, #tpu.memory_space<vmem>>, vector<4x8x1xf32>
      %38 = arith.mulf %33, %37 : vector<4x8x1xf32>
      %cst_22 = arith.constant dense<0.000000e+00> : vector<4x8xf32>
      %39 = vector.multi_reduction <add>, %36, %cst_22 [2] : vector<4x8x8xf32> to vector<4x8xf32>
      %40 = vector.shape_cast %39 : vector<4x8xf32> to vector<4x8x1xf32>
      %41 = arith.addf %38, %40 : vector<4x8x1xf32>
      %c0_23 = arith.constant 0 : index
      %c0_24 = arith.constant 0 : index
      %c0_25 = arith.constant 0 : index
      %42 = vector.load %arg13[%c0_23, %c0_24, %c0_25] : memref<4x8x1xf32, #tpu.memory_space<vmem>>, vector<4x8x1xf32>
      tpu.vector_store %arg13[%c0_23, %c0_24, %c0_25], %41 {strides = array<i32>} : memref<4x8x1xf32, #tpu.memory_space<vmem>>, vector<4x8x1xf32>,
      %c0_26 = arith.constant 0 : index
      %c0_27 = arith.constant 0 : index
      %c0_28 = arith.constant 0 : index
      %43 = vector.load %arg14[%c0_26, %c0_27, %c0_28] : memref<4x8x8xf32, #tpu.memory_space<vmem>>, vector<4x8x8xf32>
      %44 = vector.broadcast %33 : vector<4x8x1xf32> to vector<4x8x8xf32>
      %45 = arith.mulf %44, %43 : vector<4x8x8xf32>
      "tpu.trace_start"() <{level = 10 : i32, message = "hqk,hkd->hqd"}> : () -> ()
      %cst_29 = arith.constant dense<0.000000e+00> : vector<4x8x8xf32>
      %46 = tpu.matmul %36, %12, %cst_29 {dimension_numbers = #tpu.dot_dimension_numbers<[2], [1], [1], [2], [0, 0, 0, 1, 1, 2], [0], [0]>} : vector<4x8x8xf32>, vector<4x8x8xf32>, vector<4x8x8xf32> -> vector<4x8x8xf32>
      "tpu.trace_stop"() : () -> ()
      %47 = arith.addf %45, %46 : vector<4x8x8xf32>
      %c0_30 = arith.constant 0 : index
      %c0_31 = arith.constant 0 : index
      %c0_32 = arith.constant 0 : index
      %48 = vector.load %arg14[%c0_30, %c0_31, %c0_32] : memref<4x8x8xf32, #tpu.memory_space<vmem>>, vector<4x8x8xf32>
      tpu.vector_store %arg14[%c0_30, %c0_31, %c0_32], %47 {strides = array<i32>} : memref<4x8x8xf32, #tpu.memory_space<vmem>>, vector<4x8x8xf32>,
      %c0_33 = arith.constant 0 : index
      %c0_34 = arith.constant 0 : index
      %c0_35 = arith.constant 0 : index
      %49 = vector.load %arg12[%c0_33, %c0_34, %c0_35] : memref<4x8x1xf32, #tpu.memory_space<vmem>>, vector<4x8x1xf32>
      tpu.vector_store %arg12[%c0_33, %c0_34, %c0_35], %31 {strides = array<i32>} : memref<4x8x1xf32, #tpu.memory_space<vmem>>, vector<4x8x1xf32>,
      %c0_36 = arith.constant 0 : index
      %c0_37 = arith.constant 0 : index
      %c0_38 = arith.constant 0 : index
      %50 = vector.load %arg14[%c0_36, %c0_37, %c0_38] : memref<4x8x8xf32, #tpu.memory_space<vmem>>, vector<4x8x8xf32>
      %c0_39 = arith.constant 0 : index
      %c0_40 = arith.constant 0 : index
      %c0_41 = arith.constant 0 : index
      %51 = vector.load %arg13[%c0_39, %c0_40, %c0_41] : memref<4x8x1xf32, #tpu.memory_space<vmem>>, vector<4x8x1xf32>
      %52 = tpu.reciprocal %51 {approx = true} : vector<4x8x1xf32> -> vector<4x8x1xf32>
      %53 = vector.broadcast %52 : vector<4x8x1xf32> to vector<4x8x8xf32>
      %54 = arith.mulf %50, %53 : vector<4x8x8xf32>
      %cst_42 = arith.constant 0.000000e+00 : f32
      %55 = vector.broadcast %cst_42 : f32 to vector<8x32xf32>
      %56 = vector.extract_strided_slice %54 {offsets = [0, 0, 0], sizes = [1, 8, 8], strides = [1, 1, 1]} : vector<4x8x8xf32> to vector<1x8x8xf32>
      %57 = vector.shape_cast %56 : vector<1x8x8xf32> to vector<8x8xf32>
      %c0_43 = arith.constant 0 : index
      %c0_44 = arith.constant 0 : index
      %c0_45 = arith.constant 0 : index
      %58 = vector.load %arg8[%c0_43, %c0_44, %c0_45] : memref<4x8x32xf32, #tpu.memory_space<vmem>>, vector<1x8x32xf32>
      %59 = vector.shape_cast %58 : vector<1x8x32xf32> to vector<8x32xf32>
      %cst_46 = arith.constant dense<0.000000e+00> : vector<8x32xf32>
      %60 = tpu.matmul %57, %59, %cst_46 {dimension_numbers = #tpu.dot_dimension_numbers<[1], [0], [0], [1], [0, 0, 1, 1], [], []>} : vector<8x8xf32>, vector<8x32xf32>, vector<8x32xf32> -> vector<8x32xf32>
      %61 = arith.addf %55, %60 : vector<8x32xf32>
      %62 = vector.extract_strided_slice %54 {offsets = [1, 0, 0], sizes = [1, 8, 8], strides = [1, 1, 1]} : vector<4x8x8xf32> to vector<1x8x8xf32>
      %63 = vector.shape_cast %62 : vector<1x8x8xf32> to vector<8x8xf32>
      %c1 = arith.constant 1 : index
      %c0_47 = arith.constant 0 : index
      %c0_48 = arith.constant 0 : index
      %64 = vector.load %arg8[%c1, %c0_47, %c0_48] : memref<4x8x32xf32, #tpu.memory_space<vmem>>, vector<1x8x32xf32>
      %65 = vector.shape_cast %64 : vector<1x8x32xf32> to vector<8x32xf32>
      %cst_49 = arith.constant dense<0.000000e+00> : vector<8x32xf32>
      %66 = tpu.matmul %63, %65, %cst_49 {dimension_numbers = #tpu.dot_dimension_numbers<[1], [0], [0], [1], [0, 0, 1, 1], [], []>} : vector<8x8xf32>, vector<8x32xf32>, vector<8x32xf32> -> vector<8x32xf32>
      %67 = arith.addf %61, %66 : vector<8x32xf32>
      %68 = vector.extract_strided_slice %54 {offsets = [2, 0, 0], sizes = [1, 8, 8], strides = [1, 1, 1]} : vector<4x8x8xf32> to vector<1x8x8xf32>
      %69 = vector.shape_cast %68 : vector<1x8x8xf32> to vector<8x8xf32>
      %c2 = arith.constant 2 : index
      %c0_50 = arith.constant 0 : index
      %c0_51 = arith.constant 0 : index
      %70 = vector.load %arg8[%c2, %c0_50, %c0_51] : memref<4x8x32xf32, #tpu.memory_space<vmem>>, vector<1x8x32xf32>
      %71 = vector.shape_cast %70 : vector<1x8x32xf32> to vector<8x32xf32>
      %cst_52 = arith.constant dense<0.000000e+00> : vector<8x32xf32>
      %72 = tpu.matmul %69, %71, %cst_52 {dimension_numbers = #tpu.dot_dimension_numbers<[1], [0], [0], [1], [0, 0, 1, 1], [], []>} : vector<8x8xf32>, vector<8x32xf32>, vector<8x32xf32> -> vector<8x32xf32>
      %73 = arith.addf %67, %72 : vector<8x32xf32>
      %74 = vector.extract_strided_slice %54 {offsets = [3, 0, 0], sizes = [1, 8, 8], strides = [1, 1, 1]} : vector<4x8x8xf32> to vector<1x8x8xf32>
      %75 = vector.shape_cast %74 : vector<1x8x8xf32> to vector<8x8xf32>
      %c3 = arith.constant 3 : index
      %c0_53 = arith.constant 0 : index
      %c0_54 = arith.constant 0 : index
      %76 = vector.load %arg8[%c3, %c0_53, %c0_54] : memref<4x8x32xf32, #tpu.memory_space<vmem>>, vector<1x8x32xf32>
      %77 = vector.shape_cast %76 : vector<1x8x32xf32> to vector<8x32xf32>
      %cst_55 = arith.constant dense<0.000000e+00> : vector<8x32xf32>
      %78 = tpu.matmul %75, %77, %cst_55 {dimension_numbers = #tpu.dot_dimension_numbers<[1], [0], [0], [1], [0, 0, 1, 1], [], []>} : vector<8x8xf32>, vector<8x32xf32>, vector<8x32xf32> -> vector<8x32xf32>
      %79 = arith.addf %73, %78 : vector<8x32xf32>
      %c0_56 = arith.constant 0 : index
      %c0_57 = arith.constant 0 : index
      %c0_58 = arith.constant 0 : index
      %80 = vector.load %arg4[%c0_56, %c0_57, %c0_58] : memref<1x8x32xf32, #tpu.memory_space<vmem>>, vector<1x8x32xf32>
      %81 = vector.shape_cast %80 : vector<1x8x32xf32> to vector<8x32xf32>
      %82 = arith.addf %81, %79 : vector<8x32xf32>
      %83 = arith.mulf %82, %82 : vector<8x32xf32>
      %cst_59 = arith.constant dense<0.000000e+00> : vector<8xf32>
      %84 = vector.multi_reduction <add>, %83, %cst_59 [1] : vector<8x32xf32> to vector<8xf32>
      %85 = vector.shape_cast %84 : vector<8xf32> to vector<8x1xf32>
      %cst_60 = arith.constant 3.200000e+01 : f32
      %86 = vector.broadcast %cst_60 : f32 to vector<8x1xf32>
      %87 = arith.divf %85, %86 : vector<8x1xf32>
      %cst_61 = arith.constant 9.99999974E-6 : f32
      %88 = vector.broadcast %cst_61 : f32 to vector<8x1xf32>
      %89 = arith.addf %87, %88 : vector<8x1xf32>
      %90 = math.rsqrt %89 : vector<8x1xf32>
      %91 = vector.broadcast %90 : vector<8x1xf32> to vector<8x32xf32>
      %92 = arith.mulf %82, %91 : vector<8x32xf32>
      %c0_62 = arith.constant 0 : index
      %c0_63 = arith.constant 0 : index
      %93 = vector.load %arg9[%c0_62, %c0_63] : memref<32x128xf32, #tpu.memory_space<vmem>>, vector<32x128xf32>
      %cst_64 = arith.constant dense<0.000000e+00> : vector<8x128xf32>
      %94 = tpu.matmul %92, %93, %cst_64 {dimension_numbers = #tpu.dot_dimension_numbers<[1], [0], [0], [1], [0, 0, 1, 1], [], []>} : vector<8x32xf32>, vector<32x128xf32>, vector<8x128xf32> -> vector<8x128xf32>
      %c0_65 = arith.constant 0 : index
      %c0_66 = arith.constant 0 : index
      %95 = vector.load %arg10[%c0_65, %c0_66] : memref<128x32xf32, #tpu.memory_space<vmem>>, vector<128x32xf32>
      %cst_67 = arith.constant dense<0.000000e+00> : vector<8x32xf32>
      %96 = tpu.matmul %94, %95, %cst_67 {dimension_numbers = #tpu.dot_dimension_numbers<[1], [0], [0], [1], [0, 0, 1, 1], [], []>} : vector<8x128xf32>, vector<128x32xf32>, vector<8x32xf32> -> vector<8x32xf32>
      %97 = arith.negf %96 : vector<8x32xf32>
      %98 = math.exp %97 : vector<8x32xf32>
      %cst_68 = arith.constant 1.000000e+00 : f32
      %99 = vector.broadcast %cst_68 : f32 to vector<8x32xf32>
      %100 = arith.addf %99, %98 : vector<8x32xf32>
      %101 = arith.divf %99, %100 : vector<8x32xf32>
      %102 = arith.mulf %96, %101 : vector<8x32xf32>
      %103 = arith.addf %82, %102 : vector<8x32xf32>
      %c0_69 = arith.constant 0 : index
      %c0_70 = arith.constant 0 : index
      %c0_71 = arith.constant 0 : index
      %104 = vector.load %arg11[%c0_69, %c0_70, %c0_71] : memref<1x8x32xf32, #tpu.memory_space<vmem>>, vector<1x8x32xf32>
      %105 = vector.shape_cast %104 : vector<1x8x32xf32> to vector<8x32xf32>
      %106 = vector.shape_cast %103 : vector<8x32xf32> to vector<1x8x32xf32>
      tpu.vector_store %arg11[%c0_69, %c0_70, %c0_71], %106 {strides = array<i32>} : memref<1x8x32xf32, #tpu.memory_space<vmem>>, vector<1x8x32xf32>,
    } else {
    }
    return
  }
  func.func @transform_0(%arg0: i32, %arg1: i32, %arg2: memref<1xi32, #tpu.memory_space<smem>>, %arg3: memref<1xi32, #tpu.memory_space<smem>>) -> (i32, i32, i32) {
    %0 = arith.index_cast %arg1 : i32 to index
    %1 = memref.load %arg2[%0] : memref<1xi32, #tpu.memory_space<smem>>
    %c0_i32 = arith.constant 0 : i32
    %c0_i32_0 = arith.constant 0 : i32
    return %arg0, %1, %c0_i32 : i32, i32, i32
  }
  func.func @transform_1(%arg0: i32, %arg1: i32, %arg2: memref<1xi32, #tpu.memory_space<smem>>, %arg3: memref<1xi32, #tpu.memory_space<smem>>) -> (i32, i32, i32, i32) {
    %0 = arith.index_cast %arg1 : i32 to index
    %1 = memref.load %arg2[%0] : memref<1xi32, #tpu.memory_space<smem>>
    %c0_i32 = arith.constant 0 : i32
    %c0_i32_0 = arith.constant 0 : i32
    %c0_i32_1 = arith.constant 0 : i32
    return %arg0, %c0_i32, %1, %c0_i32_0 : i32, i32, i32, i32
  }
  func.func @transform_2(%arg0: i32, %arg1: i32, %arg2: memref<1xi32, #tpu.memory_space<smem>>, %arg3: memref<1xi32, #tpu.memory_space<smem>>) -> (i32, i32, i32, i32) {
    %0 = arith.index_cast %arg1 : i32 to index
    %1 = memref.load %arg3[%0] : memref<1xi32, #tpu.memory_space<smem>>
    %c0_i32 = arith.constant 0 : i32
    %c0_i32_0 = arith.constant 0 : i32
    %c0_i32_1 = arith.constant 0 : i32
    return %arg0, %c0_i32, %1, %c0_i32_0 : i32, i32, i32, i32
  }
  func.func @transform_3(%arg0: i32, %arg1: i32, %arg2: memref<1xi32, #tpu.memory_space<smem>>, %arg3: memref<1xi32, #tpu.memory_space<smem>>) -> (i32, i32, i32, i32) {
    %0 = arith.index_cast %arg1 : i32 to index
    %1 = memref.load %arg3[%0] : memref<1xi32, #tpu.memory_space<smem>>
    %c0_i32 = arith.constant 0 : i32
    %c0_i32_0 = arith.constant 0 : i32
    %c0_i32_1 = arith.constant 0 : i32
    return %arg0, %c0_i32, %1, %c0_i32_0 : i32, i32, i32, i32
  }
  func.func @transform_4(%arg0: i32, %arg1: i32, %arg2: memref<1xi32, #tpu.memory_space<smem>>, %arg3: memref<1xi32, #tpu.memory_space<smem>>) -> (i32, i32, i32) {
    %c0_i32 = arith.constant 0 : i32
    %c0_i32_0 = arith.constant 0 : i32
    %c0_i32_1 = arith.constant 0 : i32
    %c0_i32_2 = arith.constant 0 : i32
    return %c0_i32, %c0_i32_0, %c0_i32_1 : i32, i32, i32
  }
  func.func @transform_5(%arg0: i32, %arg1: i32, %arg2: memref<1xi32, #tpu.memory_space<smem>>, %arg3: memref<1xi32, #tpu.memory_space<smem>>) -> (i32, i32) {
    %c0_i32 = arith.constant 0 : i32
    %c0_i32_0 = arith.constant 0 : i32
    %c0_i32_1 = arith.constant 0 : i32
    return %c0_i32, %c0_i32_0 : i32, i32
  }
  func.func @transform_6(%arg0: i32, %arg1: i32, %arg2: memref<1xi32, #tpu.memory_space<smem>>, %arg3: memref<1xi32, #tpu.memory_space<smem>>) -> (i32, i32) {
    %c0_i32 = arith.constant 0 : i32
    %c0_i32_0 = arith.constant 0 : i32
    %c0_i32_1 = arith.constant 0 : i32
    return %c0_i32, %c0_i32_0 : i32, i32
  }
  func.func @transform_7(%arg0: i32, %arg1: i32, %arg2: memref<1xi32, #tpu.memory_space<smem>>, %arg3: memref<1xi32, #tpu.memory_space<smem>>) -> (i32, i32, i32) {
    %0 = arith.index_cast %arg1 : i32 to index
    %1 = memref.load %arg2[%0] : memref<1xi32, #tpu.memory_space<smem>>
    %c0_i32 = arith.constant 0 : i32
    %c0_i32_0 = arith.constant 0 : i32
    return %arg0, %1, %c0_i32 : i32, i32, i32
  }
}

</mosaic_0001>

<llo_original>
// kernel: tpu_custom_call.1
$region0: #{tpu_custom_call.1}
  #allocation0 [shape = 'u32[]', space=smem, size = 0x4, offset = 0x4, fixed_abs, tag = 'smem constant byte address 0x4 - core index']
  #allocation1 [shape = 'u32[144,128]{1,0:T(1,128)}', space=vmem, size = 0x12000, scoped, tag = 'internal scratch']
  #allocation2 [shape = 'f32[4,8,1]{2,1,0:T(8,128)}', space=vmem, size = 0x4000, scoped, tag = 'scratch operand']
  #allocation3 [shape = 'f32[4,8,1]{2,1,0:T(8,128)}', space=vmem, size = 0x4000, scoped, tag = 'scratch operand']
  #allocation4 [shape = 'f32[4,8,8]{2,1,0:T(8,128)}', space=vmem, size = 0x4000, scoped, tag = 'scratch operand']
  #allocation5 [shape = 's32[1]{0}', space=sflag, size = 0x4, scoped, tag = 'scoped memory for tpu_custom_call.1']
  #allocation6 [shape = 's32[1]{0:T(128)S(6)}', space=smem, size = 0x200, scoped, tag = 'prefetched SMEM operand 0']
  #allocation7 [shape = 's32[1]{0:T(128)S(6)}', space=smem, size = 0x200, scoped, tag = 'prefetched SMEM operand 1']
  %s0 = inlined_call_operand.<no memory space> [shape: s32[1], index: 0, kind: input, shape index: {}]
  %s1 = inlined_call_operand.<no memory space> [shape: s32[1], index: 1, kind: input, shape index: {}]
  %s2 = inlined_call_operand.hbm [shape: f32[2,8,32], index: 2, kind: input, shape index: {}]
  %s3 = inlined_call_operand.vmem [shape: f32[2,4,8,8], index: 3, kind: input, shape index: {}]
  %s4 = inlined_call_operand.vmem [shape: f32[2,4,8,8], index: 4, kind: input, shape index: {}]
  %s5 = inlined_call_operand.hbm [shape: f32[2,4,8,8], index: 5, kind: input, shape index: {}]
  %s6 = inlined_call_operand.vmem [shape: f32[4,8,32], index: 6, kind: input, shape index: {}]
  %s7 = inlined_call_operand.hbm [shape: f32[32,128], index: 7, kind: input, shape index: {}]
  %s8 = inlined_call_operand.vmem [shape: f32[128,32], index: 8, kind: input, shape index: {}]
  %s9 = inlined_call_operand.hbm [shape: f32[2,8,32], index: 9, kind: output, shape index: {}]
  %s10 = sld [smem:[#allocation0]]
  $region85: #{tpu_custom_call.1} parent=0
    _
  %s12 = ssub.s32 1, %s10
  %s13 = scalar_select 0, %s12, %s10
  %14 = sst [smem:[#allocation6]] %s0
  %15 = sst [smem:[#allocation7]] %s1
  $region1: #{tpu_custom_call.1} parent=0
    #allocation8 [shape = 'u8[8192]{0}', space=vmem, size = 0x2000, scoped, tag = 'input window, operand 2']
    #allocation9 [shape = 's32[2]{0}', space=sflag, size = 0x8, scoped, tag = 'scoped memory for tpu_custom_call.1']
    #allocation10 [shape = 's32[2]{0}', space=sflag, size = 0x8, scoped, tag = 'scoped memory for tpu_custom_call.1']
    #allocation11 [shape = 'u8[32768]{0}', space=vmem, size = 0x8000, scoped, tag = 'input window, operand 5']
    #allocation12 [shape = 's32[2]{0}', space=sflag, size = 0x8, scoped, tag = 'scoped memory for tpu_custom_call.1']
    #allocation13 [shape = 'u8[16384]{0}', space=vmem, size = 0x4000, scoped, tag = 'input window, operand 7, single buffered']
    #allocation14 [shape = 'u8[8192]{0}', space=vmem, size = 0x2000, scoped, tag = 'output window, operand 0']
    %16 = vsyncpa [#allocation9], 0
    %s17 = scalar_lea.sflag [#allocation9], 1
    %18 = vsyncpa %s17, 0
    %19 = vsyncpa [#allocation12], 0
    %s20 = scalar_lea.sflag [#allocation12], 1
    %21 = vsyncpa %s20, 0
    %22 = vsyncpa [#allocation10], 0
    %s23 = scalar_lea.sflag [#allocation10], 1
    %24 = vsyncpa %s23, 0
    loop: start=0, step=1, limit=4
    $region2: #{tpu_custom_call.1} parent=1 // loop_pre_header
      _
    $region3: #{tpu_custom_call.1} parent=1 // loop_header
      %s26 = sphi 0, %s30
      %p27 = scmp.ge.s32.totalorder %s26, 4
      %s33 = sphi 0, %s45
      %s34 = sphi 0, %s41
      %s35 = sphi 0, %s33
      %s36 = sphi 0, %s34
      %s37 = sphi 0, %s35
      %s38 = sphi 0, %s36
      %s52 = sphi 0, %s54
      %s55 = sphi 0, %s52
      %s56 = sphi 0, %s55
      %s72 = sphi 0, %s56
      %s82 = sphi 0, %s84
      %s85 = sphi 0, %s82
      %s86 = sphi 0, %s85
      %s102 = sphi 0, %s86
      %s112 = sphi 0, %s114
      %s115 = sphi 0, %s112
      %s116 = sphi 0, %s115
      %s132 = sphi 0, %s116
      %s142 = sphi 0, %s144
      %s145 = sphi 0, %s142
      %s146 = sphi 0, %s145
      %s162 = sphi 0, %s146
      %s166 = sphi 0, %s166
      %s168 = sphi 0, %s166
      %s169 = sphi 0, %s168
      %s183 = sphi 0, %s169
      %s187 = sphi 0, %s187
      %s189 = sphi 0, %s187
      %s190 = sphi 0, %s189
      %s204 = sphi 0, %s190
      %s208 = sphi 0, %s208
      %s210 = sphi 0, %s208
      %s211 = sphi 0, %s210
      %s225 = sphi 0, %s211
      %s235 = sphi 0, %s237
      %s238 = sphi 0, %s235
      %s239 = sphi 0, %s238
      %s255 = sphi 0, %s239
    $region4: #{tpu_custom_call.1} parent=1 // loop_header_branch
      %29 = sbr.rel (%p27) target = $region8
    $region5: #{tpu_custom_call.1} parent=1 // loop_body
      %s31 = ssub.s32 %s26, 1
      %s32 = ssub.s32 %s26, 2
      %s39 = sadd.s32 1, %s34
      %p40 = scmp.ge.s32.totalorder %s39, 1
      %s41 = scalar_select %p40, 0, %s39
      %s42 = sadd.s32 1, %s33
      %s43 = scalar_select %p40, %s42, %s33
      %p44 = scmp.ge.s32.totalorder %s43, 2
      %s45 = scalar_select %p44, 0, %s43
      %s46 = sld [smem:[#allocation6 + %s34]]
      %s47 = sld [smem:[#allocation6 + %s41]]
      %s48 = ssub.s32 %s33, %s45
      %s49 = ssub.s32 %s46, %s47
      %s50 = sor.u32 %s48, %s49
      %p51 = scmp.eq.s32.totalorder %s50, 0
      %s53 = sadd.s32 %s52, 1
      %s54 = scalar_select %p51, %s52, %s53
      %p57 = pneg %p51
      %p58 = scmp.eq.s32.totalorder %s26, 1
      %p59 = por %p57, %p58
      %p60 = scmp.ne.s32.totalorder %s52, %s55
      %p61 = scmp.eq.s32.totalorder %s26, 0
      %p62 = por %p60, %p61
      %p63 = scmp.ne.s32.totalorder %s52, %s55
      %p64 = scmp.eq.s32.totalorder %s31, 1
      %p65 = por %p63, %p64
      %p66 = scmp.ne.s32.totalorder %s55, %s56
      %p67 = scmp.eq.s32.totalorder %s31, 0
      %p68 = por %p66, %p67
      %p69 = scmp.ne.s32.totalorder %s55, %s56
      %p70 = scmp.eq.s32.totalorder %s32, 1
      %p71 = por %p69, %p70
      %p73 = scmp.ne.s32.totalorder %s56, %s72
      %p74 = scmp.eq.s32.totalorder %s32, 0
      %p75 = por %p73, %p74
      %s76 = sld [smem:[#allocation6 + %s34]]
      %s77 = sld [smem:[#allocation6 + %s41]]
      %s78 = ssub.s32 %s33, %s45
      %s79 = ssub.s32 %s76, %s77
      %s80 = sor.u32 %s78, %s79
      %p81 = scmp.eq.s32.totalorder %s80, 0
      %s83 = sadd.s32 %s82, 1
      %s84 = scalar_select %p81, %s82, %s83
      %p87 = pneg %p81
      %p88 = scmp.eq.s32.totalorder %s26, 1
      %p89 = por %p87, %p88
      %p90 = scmp.ne.s32.totalorder %s82, %s85
      %p91 = scmp.eq.s32.totalorder %s26, 0
      %p92 = por %p90, %p91
      %p93 = scmp.ne.s32.totalorder %s82, %s85
      %p94 = scmp.eq.s32.totalorder %s31, 1
      %p95 = por %p93, %p94
      %p96 = scmp.ne.s32.totalorder %s85, %s86
      %p97 = scmp.eq.s32.totalorder %s31, 0
      %p98 = por %p96, %p97
      %p99 = scmp.ne.s32.totalorder %s85, %s86
      %p100 = scmp.eq.s32.totalorder %s32, 1
      %p101 = por %p99, %p100
      %p103 = scmp.ne.s32.totalorder %s86, %s102
      %p104 = scmp.eq.s32.totalorder %s32, 0
      %p105 = por %p103, %p104
      %s106 = sld [smem:[#allocation7 + %s34]]
      %s107 = sld [smem:[#allocation7 + %s41]]
      %s108 = ssub.s32 %s33, %s45
      %s109 = ssub.s32 %s106, %s107
      %s110 = sor.u32 %s108, %s109
      %p111 = scmp.eq.s32.totalorder %s110, 0
      %s113 = sadd.s32 %s112, 1
      %s114 = scalar_select %p111, %s112, %s113
      %p117 = pneg %p111
      %p118 = scmp.eq.s32.totalorder %s26, 1
      %p119 = por %p117, %p118
      %p120 = scmp.ne.s32.totalorder %s112, %s115
      %p121 = scmp.eq.s32.totalorder %s26, 0
      %p122 = por %p120, %p121
      %p123 = scmp.ne.s32.totalorder %s112, %s115
      %p124 = scmp.eq.s32.totalorder %s31, 1
      %p125 = por %p123, %p124
      %p126 = scmp.ne.s32.totalorder %s115, %s116
      %p127 = scmp.eq.s32.totalorder %s31, 0
      %p128 = por %p126, %p127
      %p129 = scmp.ne.s32.totalorder %s115, %s116
      %p130 = scmp.eq.s32.totalorder %s32, 1
      %p131 = por %p129, %p130
      %p133 = scmp.ne.s32.totalorder %s116, %s132
      %p134 = scmp.eq.s32.totalorder %s32, 0
      %p135 = por %p133, %p134
      %s136 = sld [smem:[#allocation7 + %s34]]
      %s137 = sld [smem:[#allocation7 + %s41]]
      %s138 = ssub.s32 %s33, %s45
      %s139 = ssub.s32 %s136, %s137
      %s140 = sor.u32 %s138, %s139
      %p141 = scmp.eq.s32.totalorder %s140, 0
      %s143 = sadd.s32 %s142, 1
      %s144 = scalar_select %p141, %s142, %s143
      %p147 = pneg %p141
      %p148 = scmp.eq.s32.totalorder %s26, 1
      %p149 = por %p147, %p148
      %p150 = scmp.ne.s32.totalorder %s142, %s145
      %p151 = scmp.eq.s32.totalorder %s26, 0
      %p152 = por %p150, %p151
      %p153 = scmp.ne.s32.totalorder %s142, %s145
      %p154 = scmp.eq.s32.totalorder %s31, 1
      %p155 = por %p153, %p154
      %p156 = scmp.ne.s32.totalorder %s145, %s146
      %p157 = scmp.eq.s32.totalorder %s31, 0
      %p158 = por %p156, %p157
      %p159 = scmp.ne.s32.totalorder %s145, %s146
      %p160 = scmp.eq.s32.totalorder %s32, 1
      %p161 = por %p159, %p160
      %p163 = scmp.ne.s32.totalorder %s146, %s162
      %p164 = scmp.eq.s32.totalorder %s32, 0
      %p165 = por %p163, %p164
      %s167 = sadd.s32 %s166, 1
      %p170 = scmp.eq.s32.totalorder %s26, 1
      %p171 = scmp.ne.s32.totalorder %s166, %s168
      %p172 = scmp.eq.s32.totalorder %s26, 0
      %p173 = por %p171, %p172
      %p174 = scmp.ne.s32.totalorder %s166, %s168
      %p175 = scmp.eq.s32.totalorder %s31, 1
      %p176 = por %p174, %p175
      %p177 = scmp.ne.s32.totalorder %s168, %s169
      %p178 = scmp.eq.s32.totalorder %s31, 0
      %p179 = por %p177, %p178
      %p180 = scmp.ne.s32.totalorder %s168, %s169
      %p181 = scmp.eq.s32.totalorder %s32, 1
      %p182 = por %p180, %p181
      %p184 = scmp.ne.s32.totalorder %s169, %s183
      %p185 = scmp.eq.s32.totalorder %s32, 0
      %p186 = por %p184, %p185
      %s188 = sadd.s32 %s187, 1
      %p191 = scmp.eq.s32.totalorder %s26, 1
      %p192 = scmp.ne.s32.totalorder %s187, %s189
      %p193 = scmp.eq.s32.totalorder %s26, 0
      %p194 = por %p192, %p193
      %p195 = scmp.ne.s32.totalorder %s187, %s189
      %p196 = scmp.eq.s32.totalorder %s31, 1
      %p197 = por %p195, %p196
      %p198 = scmp.ne.s32.totalorder %s189, %s190
      %p199 = scmp.eq.s32.totalorder %s31, 0
      %p200 = por %p198, %p199
      %p201 = scmp.ne.s32.totalorder %s189, %s190
      %p202 = scmp.eq.s32.totalorder %s32, 1
      %p203 = por %p201, %p202
      %p205 = scmp.ne.s32.totalorder %s190, %s204
      %p206 = scmp.eq.s32.totalorder %s32, 0
      %p207 = por %p205, %p206
      %s209 = sadd.s32 %s208, 1
      %p212 = scmp.eq.s32.totalorder %s26, 1
      %p213 = scmp.ne.s32.totalorder %s208, %s210
      %p214 = scmp.eq.s32.totalorder %s26, 0
      %p215 = por %p213, %p214
      %p216 = scmp.ne.s32.totalorder %s208, %s210
      %p217 = scmp.eq.s32.totalorder %s31, 1
      %p218 = por %p216, %p217
      %p219 = scmp.ne.s32.totalorder %s210, %s211
      %p220 = scmp.eq.s32.totalorder %s31, 0
      %p221 = por %p219, %p220
      %p222 = scmp.ne.s32.totalorder %s210, %s211
      %p223 = scmp.eq.s32.totalorder %s32, 1
      %p224 = por %p222, %p223
      %p226 = scmp.ne.s32.totalorder %s211, %s225
      %p227 = scmp.eq.s32.totalorder %s32, 0
      %p228 = por %p226, %p227
      %s229 = sld [smem:[#allocation6 + %s34]]
      %s230 = sld [smem:[#allocation6 + %s41]]
      %s231 = ssub.s32 %s33, %s45
      %s232 = ssub.s32 %s229, %s230
      %s233 = sor.u32 %s231, %s232
      %p234 = scmp.eq.s32.totalorder %s233, 0
      %s236 = sadd.s32 %s235, 1
      %s237 = scalar_select %p234, %s235, %s236
      %p240 = pneg %p234
      %p241 = scmp.eq.s32.totalorder %s26, 1
      %p242 = por %p240, %p241
      %p243 = scmp.ne.s32.totalorder %s235, %s238
      %p244 = scmp.eq.s32.totalorder %s26, 0
      %p245 = por %p243, %p244
      %p246 = scmp.ne.s32.totalorder %s235, %s238
      %p247 = scmp.eq.s32.totalorder %s31, 1
      %p248 = por %p246, %p247
      %p249 = scmp.ne.s32.totalorder %s238, %s239
      %p250 = scmp.eq.s32.totalorder %s31, 0
      %p251 = por %p249, %p250
      %p252 = scmp.ne.s32.totalorder %s238, %s239
      %p253 = scmp.eq.s32.totalorder %s32, 1
      %p254 = por %p252, %p253
      %p256 = scmp.ne.s32.totalorder %s239, %s255
      %p257 = scmp.eq.s32.totalorder %s32, 0
      %p258 = por %p256, %p257
      %p259 = scmp.le.s32.totalorder 1, %s26
      %p260 = scmp.lt.s32.totalorder %s26, 3
      %p261 = pnand %p259, %p260
      %p262 = pneg %p261
      // Predicated region
      $region9: #{tpu_custom_call.1} parent=5 // pred_check
        _
      $region10: #{tpu_custom_call.1} parent=5 // pred_check_branch
        %264 = sbr.rel (%p261) target = $region12
      $region11: #{tpu_custom_call.1} parent=5 // pred_region
        %s265 = ssub.s32 %s26, 1
        // Predicated region
        $region13: #{tpu_custom_call.1} parent=11 // pred_check
          %p266 = pneg %p179
        $region14: #{tpu_custom_call.1} parent=11 // pred_check_branch
          %268 = sbr.rel (%p266) target = $region16
        $region15: #{tpu_custom_call.1} parent=11 // pred_region
          _
        $region16: #{tpu_custom_call.1} parent=11 // pred_fallthru
          _
        // Predicated region
        $region17: #{tpu_custom_call.1} parent=11 // pred_check
          %p269 = pneg %p200
        $region18: #{tpu_custom_call.1} parent=11 // pred_check_branch
          %271 = sbr.rel (%p269) target = $region20
        $region19: #{tpu_custom_call.1} parent=11 // pred_region
          %s273 = ssub.s32 512, 512
          %274 = vsyncadd [#allocation12], %s273
          %s275 = sshll.u32 [#allocation13], 4
          %s276 = int_to_ptr.vmem [resolvable:$true] %s275
          %281 = dma.hbm_to_vmem [thread:$0]  %s7, 512, %s276, [#allocation12], 128, 128, 8
        $region20: #{tpu_custom_call.1} parent=11 // pred_fallthru
          _
        // Predicated region
        $region21: #{tpu_custom_call.1} parent=11 // pred_check
          %p282 = pneg %p221
        $region22: #{tpu_custom_call.1} parent=11 // pred_check_branch
          %284 = sbr.rel (%p282) target = $region24
        $region23: #{tpu_custom_call.1} parent=11 // pred_region
          _
        $region24: #{tpu_custom_call.1} parent=11 // pred_fallthru
          _
      $region12: #{tpu_custom_call.1} parent=5 // pred_fallthru
        _
      %p285 = scmp.lt.s32.totalorder %s26, 2
      // Predicated region
      $region25: #{tpu_custom_call.1} parent=5 // pred_check
        %p286 = pneg %p285
      $region26: #{tpu_custom_call.1} parent=5 // pred_check_branch
        %288 = sbr.rel (%p286) target = $region28
      $region27: #{tpu_custom_call.1} parent=5 // pred_region
        // Predicated region
        $region29: #{tpu_custom_call.1} parent=27 // pred_check
          %p289 = pneg %p62
        $region30: #{tpu_custom_call.1} parent=27 // pred_check_branch
          %291 = sbr.rel (%p289) target = $region32
        $region31: #{tpu_custom_call.1} parent=27 // pred_region
          %s292 = sand.u32 %s52, 1
          %s293 = scalar_lea.sflag [#allocation9], %s292
          %s294 = sand.u32 %s52, 1
          %s295 = smul.addr %s294, 8
          %s296 = scalar_lea.vmem [#allocation8], %s295
          %s297 = sld [smem:[#allocation6 + %s34]]
          %s299 = ssub.s32 128, 128
          %300 = vsyncadd %s293, %s299
          %s301 = sadd.s32 %s297, %s33
          %s302 = smul.addr %s301, 128
          %s303 = scalar_lea.hbm %s2, %s302
          %s305 = sshll.u32 %s296, 4
          %s306 = int_to_ptr.vmem [resolvable:$true] %s305
          %308 = dma.hbm_to_vmem [thread:$0]  %s303, 128, %s306, %s293
        $region32: #{tpu_custom_call.1} parent=27 // pred_fallthru
          _
        // Predicated region
        $region33: #{tpu_custom_call.1} parent=27 // pred_check
          %p309 = pneg %p92
        $region34: #{tpu_custom_call.1} parent=27 // pred_check_branch
          %311 = sbr.rel (%p309) target = $region36
        $region35: #{tpu_custom_call.1} parent=27 // pred_region
          %s312 = sld [smem:[#allocation6 + %s34]]
          %p313 = scmp.lt.s32.totalorder %s33, 1
          %s314 = scalar_select %p313, %s33, 1
          %p315 = scmp.lt.s32.totalorder %s312, 0
          %s316 = scalar_select %p315, %s312, 0
          %s317 = smul.addr %s314, 4
          %s318 = sadd.s32 %s316, %s317
          %s319 = smul.addr %s318, 8
          %s320 = scalar_lea.vmem %s3, %s319
          %s321 = sld [smem:[#allocation6 + %s34]]
        $region36: #{tpu_custom_call.1} parent=27 // pred_fallthru
          _
        // Predicated region
        $region37: #{tpu_custom_call.1} parent=27 // pred_check
          %p322 = pneg %p122
        $region38: #{tpu_custom_call.1} parent=27 // pred_check_branch
          %324 = sbr.rel (%p322) target = $region40
        $region39: #{tpu_custom_call.1} parent=27 // pred_region
          %s325 = sld [smem:[#allocation7 + %s34]]
          %p326 = scmp.lt.s32.totalorder %s33, 1
          %s327 = scalar_select %p326, %s33, 1
          %p328 = scmp.lt.s32.totalorder %s325, 0
          %s329 = scalar_select %p328, %s325, 0
          %s330 = smul.addr %s327, 4
          %s331 = sadd.s32 %s329, %s330
          %s332 = smul.addr %s331, 8
          %s333 = scalar_lea.vmem %s4, %s332
          %s334 = sld [smem:[#allocation7 + %s34]]
        $region40: #{tpu_custom_call.1} parent=27 // pred_fallthru
          _
        // Predicated region
        $region41: #{tpu_custom_call.1} parent=27 // pred_check
          %p335 = pneg %p152
        $region42: #{tpu_custom_call.1} parent=27 // pred_check_branch
          %337 = sbr.rel (%p335) target = $region44
        $region43: #{tpu_custom_call.1} parent=27 // pred_region
          %s338 = sand.u32 %s26, 1
          %s339 = scalar_lea.sflag [#allocation12], %s338
          %s340 = sand.u32 %s142, 1
          %s341 = smul.addr %s340, 32
          %s342 = scalar_lea.vmem [#allocation11], %s341
          %s343 = sld [smem:[#allocation7 + %s34]]
          %s345 = ssub.s32 512, 512
          %346 = vsyncadd %s339, %s345
          %s347 = smul.addr %s33, 4
          %s348 = sadd.s32 %s343, %s347
          %s349 = smul.addr %s348, 128
          %s350 = scalar_lea.hbm %s5, %s349
          %s351 = sshll.u32 %s342, 4
          %s352 = int_to_ptr.vmem [resolvable:$true] %s351
          %357 = dma.hbm_to_vmem [thread:$0]  %s350, 512, %s352, %s339, 128, 128, 8
        $region44: #{tpu_custom_call.1} parent=27 // pred_fallthru
          _
      $region28: #{tpu_custom_call.1} parent=5 // pred_fallthru
        _
      %p358 = scmp.le.s32.totalorder 1, %s26
      %p359 = scmp.lt.s32.totalorder %s26, 3
      %p360 = pnand %p358, %p359
      %p361 = pneg %p360
      // Predicated region
      $region45: #{tpu_custom_call.1} parent=5 // pred_check
        _
      $region46: #{tpu_custom_call.1} parent=5 // pred_check_branch
        %363 = sbr.rel (%p360) target = $region48
      $region47: #{tpu_custom_call.1} parent=5 // pred_region
        %s364 = ssub.s32 %s26, 1
        %s365 = sand.u32 %s55, 1
        %s366 = scalar_lea.sflag [#allocation9], %s365
        %s367 = sand.u32 %s55, 1
        %s368 = smul.addr %s367, 8
        %s369 = scalar_lea.vmem [#allocation8], %s368
        // Predicated region
        $region49: #{tpu_custom_call.1} parent=47 // pred_check
          %p370 = pneg %p68
        $region50: #{tpu_custom_call.1} parent=47 // pred_check_branch
          %372 = sbr.rel (%p370) target = $region52
        $region51: #{tpu_custom_call.1} parent=47 // pred_region
          %373 = dma.done %s366, 128
        $region52: #{tpu_custom_call.1} parent=47 // pred_fallthru
          _
        %s374 = sand.u32 %s31, 1
        %s375 = scalar_lea.sflag [#allocation12], %s374
        %s376 = sand.u32 %s145, 1
        %s377 = smul.addr %s376, 32
        %s378 = scalar_lea.vmem [#allocation11], %s377
        // Predicated region
        $region53: #{tpu_custom_call.1} parent=47 // pred_check
          %p379 = pneg %p158
        $region54: #{tpu_custom_call.1} parent=47 // pred_check_branch
          %381 = sbr.rel (%p379) target = $region56
        $region55: #{tpu_custom_call.1} parent=47 // pred_region
          %382 = dma.done %s375, 512
        $region56: #{tpu_custom_call.1} parent=47 // pred_fallthru
          _
        // Predicated region
        $region57: #{tpu_custom_call.1} parent=47 // pred_check
          %p383 = pneg %p200
        $region58: #{tpu_custom_call.1} parent=47 // pred_check_branch
          %385 = sbr.rel (%p383) target = $region60
        $region59: #{tpu_custom_call.1} parent=47 // pred_region
          %386 = dma.done [#allocation12], 512
        $region60: #{tpu_custom_call.1} parent=47 // pred_fallthru
          _
        %s387 = sand.u32 %s55, 1
        %s388 = scalar_lea.sflag [#allocation9], %s387
        %s389 = sand.u32 %s55, 1
        %s390 = smul.addr %s389, 8
        %s391 = scalar_lea.vmem [#allocation8], %s390
        %p392 = pneg %p68
        %p393 = pneg %p65
        %s394 = sld [smem:[#allocation6 + %s36]]
        %p395 = scmp.lt.s32.totalorder %s35, 1
        %s396 = scalar_select %p395, %s35, 1
        %p397 = scmp.lt.s32.totalorder %s394, 0
        %s398 = scalar_select %p397, %s394, 0
        %s399 = smul.addr %s396, 4
        %s400 = sadd.s32 %s398, %s399
        %s401 = smul.addr %s400, 8
        %s402 = scalar_lea.vmem %s3, %s401
        %p403 = pneg %p98
        %p404 = pneg %p95
        %s405 = sld [smem:[#allocation7 + %s36]]
        %p406 = scmp.lt.s32.totalorder %s35, 1
        %s407 = scalar_select %p406, %s35, 1
        %p408 = scmp.lt.s32.totalorder %s405, 0
        %s409 = scalar_select %p408, %s405, 0
        %s410 = smul.addr %s407, 4
        %s411 = sadd.s32 %s409, %s410
        %s412 = smul.addr %s411, 8
        %s413 = scalar_lea.vmem %s4, %s412
        %p414 = pneg %p128
        %p415 = pneg %p125
        %s416 = sand.u32 %s31, 1
        %s417 = scalar_lea.sflag [#allocation12], %s416
        %s418 = sand.u32 %s145, 1
        %s419 = smul.addr %s418, 32
        %s420 = scalar_lea.vmem [#allocation11], %s419
        %p421 = pneg %p158
        %p422 = pneg %p155
        %p423 = pneg %p179
        %p424 = pneg %p176
        %p425 = pneg %p200
        %p426 = pneg %p197
        %p427 = pneg %p221
        %p428 = pneg %p218
        %p429 = pneg %p251
        %p430 = pneg %p248
        %s431 = sand.u32 %s238, 1
        %s432 = scalar_lea.sflag [#allocation10], %s431
        %s433 = sand.u32 %s238, 1
        %s434 = smul.addr %s433, 8
        %s435 = scalar_lea.vmem [#allocation14], %s434
        %s436 = sld [smem:[#allocation6 + %s36]]
        %s437 = sld [smem:[#allocation6 + %s36]]
        %p438 = scmp.lt.s32.totalorder %s35, 1
        %s439 = scalar_select %p438, %s35, 1
        %p440 = scmp.lt.s32.totalorder %s437, 0
        %s441 = scalar_select %p440, %s437, 0
        %s442 = smul.addr %s439, 4
        %s443 = sadd.s32 %s441, %s442
        %s444 = smul.addr %s443, 8
        %s445 = scalar_lea.vmem %s3, %s444
        %s446 = sld [smem:[#allocation6 + %s36]]
        %s447 = sld [smem:[#allocation7 + %s36]]
        %p448 = scmp.lt.s32.totalorder %s35, 1
        %s449 = scalar_select %p448, %s35, 1
        %p450 = scmp.lt.s32.totalorder %s447, 0
        %s451 = scalar_select %p450, %s447, 0
        %s452 = smul.addr %s449, 4
        %s453 = sadd.s32 %s451, %s452
        %s454 = smul.addr %s453, 8
        %s455 = scalar_lea.vmem %s4, %s454
        %s456 = sld [smem:[#allocation7 + %s36]]
        %s457 = sld [smem:[#allocation7 + %s36]]
        %s458 = sld [smem:[#allocation6 + %s36]]
        %s459 = sld [smem:[#allocation6 + %s36]]
        %s460 = sld [smem:[#allocation7 + %s36]]
        %p461 = scmp.eq.s32.totalorder %s460, 0
        // Predicated region
        $region61: #{tpu_custom_call.1} parent=47 // pred_check
          %p462 = pneg %p461
        $region62: #{tpu_custom_call.1} parent=47 // pred_check_branch
          %464 = sbr.rel (%p462) target = $region64
        $region63: #{tpu_custom_call.1} parent=47 // pred_region
          %vm465 = vcmask 7168
          %466 = vst.msk [vmem:[#allocation2] sm:$0xff] %vm465, -inf
          %467 = vst.msk [vmem:[#allocation2 + $0x8] sm:$0xff] %vm465, -inf
          %468 = vst.msk [vmem:[#allocation2 + $0x10] sm:$0xff] %vm465, -inf
          %469 = vst.msk [vmem:[#allocation2 + $0x18] sm:$0xff] %vm465, -inf
          %470 = vst.msk [vmem:[#allocation3] sm:$0xff] %vm465, 0.0
          %471 = vst.msk [vmem:[#allocation3 + $0x8] sm:$0xff] %vm465, 0.0
          %472 = vst.msk [vmem:[#allocation3 + $0x10] sm:$0xff] %vm465, 0.0
          %473 = vst.msk [vmem:[#allocation3 + $0x18] sm:$0xff] %vm465, 0.0
          %vm474 = vcmask 64512
          %475 = vst.msk [vmem:[#allocation4] sm:$0xff] %vm474, 0.0
          %476 = vst.msk [vmem:[#allocation4 + $0x8] sm:$0xff] %vm474, 0.0
          %477 = vst.msk [vmem:[#allocation4 + $0x10] sm:$0xff] %vm474, 0.0
          %478 = vst.msk [vmem:[#allocation4 + $0x18] sm:$0xff] %vm474, 0.0
        $region64: #{tpu_custom_call.1} parent=47 // pred_fallthru
          _
        %v479 = vld [vmem:[%s445] sm:$0xff]
        %v480 = vld [vmem:[%s445 + $0x8] sm:$0xff]
        %v481 = vld [vmem:[%s445 + $0x10] sm:$0xff]
        %v482 = vld [vmem:[%s445 + $0x18] sm:$0xff]
        %v483 = vld [vmem:[%s455] sm:$0xff]
        %v484 = vld [vmem:[%s455 + $0x8] sm:$0xff]
        %v485 = vld [vmem:[%s455 + $0x10] sm:$0xff]
        %v486 = vld [vmem:[%s455 + $0x18] sm:$0xff]
        %v487 = vld [vmem:[%s378] sm:$0xff]
        %v488 = vld [vmem:[%s378 + $0x8] sm:$0xff]
        %v489 = vld [vmem:[%s378 + $0x10] sm:$0xff]
        %v490 = vld [vmem:[%s378 + $0x18] sm:$0xff]
        %vm491 = vcmask 64512
        %v493 = vsel %vm491, %v479, 0
        %v496 = vsel %vm491, %v483, 0
        %498 = vmatprep.subr.mxu0 0.0
        %499 = vmatpush1.xpose.msra.mxu0 0.0
        %500 = vmatprep.subr.mxu0 0.0
        %501 = vmatpush1.xpose.msra.mxu0 0.0
        %502 = vmatprep.subr.mxu0 0.0
        %503 = vmatpush1.xpose.msra.mxu0 0.0
        %504 = vmatprep.subr.mxu0 0.0
        %505 = vmatpush1.xpose.msra.mxu0 0.0
        %506 = vmatprep.subr.mxu0 0.0
        %507 = vmatpush1.xpose.msra.mxu0 0.0
        %508 = vmatprep.subr.mxu0 0.0
        %509 = vmatpush1.xpose.msra.mxu0 0.0
        %510 = vmatprep.subr.mxu0 0.0
        %511 = vmatpush1.xpose.msra.mxu0 0.0
        %512 = vmatprep.subr.mxu0 0.0
        %513 = vmatpush1.xpose.msra.mxu0 0.0
        %514 = vmatprep.subr.mxu0 0.0
        %515 = vmatpush1.xpose.msra.mxu0 0.0
        %516 = vmatprep.subr.mxu0 0.0
        %517 = vmatpush1.xpose.msra.mxu0 0.0
        %518 = vmatprep.subr.mxu0 0.0
        %519 = vmatpush1.xpose.msra.mxu0 0.0
        %520 = vmatprep.subr.mxu0 0.0
        %521 = vmatpush1.xpose.msra.mxu0 0.0
        %522 = vmatprep.subr.mxu0 0.0
        %523 = vmatpush1.xpose.msra.mxu0 0.0
        %524 = vmatprep.subr.mxu0 0.0
        %525 = vmatpush1.xpose.msra.mxu0 0.0
        %526 = vmatprep.subr.mxu0 0.0
        %527 = vmatpush1.xpose.msra.mxu0 0.0
        %528 = vmatprep.subr.mxu0 0.0
        %529 = vmatpush1.xpose.msra.mxu0 %v496
        %530 = vmatprep.subr.mxu0 0.0
        %531 = vmatpush2.xpose.msra.mxu0 0.0
        %532 = vmatprep.subr.mxu0 0.0
        %533 = vmatpush2.xpose.msra.mxu0 0.0
        %534 = vmatprep.subr.mxu0 0.0
        %535 = vmatpush2.xpose.msra.mxu0 0.0
        %536 = vmatprep.subr.mxu0 0.0
        %537 = vmatpush2.xpose.msra.mxu0 0.0
        %538 = vmatprep.subr.mxu0 0.0
        %539 = vmatpush2.xpose.msra.mxu0 0.0
        %540 = vmatprep.subr.mxu0 0.0
        %541 = vmatpush2.xpose.msra.mxu0 0.0
        %542 = vmatprep.subr.mxu0 0.0
        %543 = vmatpush2.xpose.msra.mxu0 0.0
        %544 = vmatprep.subr.mxu0 0.0
        %545 = vmatpush2.xpose.msra.mxu0 0.0
        %546 = vmatprep.subr.mxu0 0.0
        %547 = vmatpush2.xpose.msra.mxu0 0.0
        %548 = vmatprep.subr.mxu0 0.0
        %549 = vmatpush2.xpose.msra.mxu0 0.0
        %550 = vmatprep.subr.mxu0 0.0
        %551 = vmatpush2.xpose.msra.mxu0 0.0
        %552 = vmatprep.subr.mxu0 0.0
        %553 = vmatpush2.xpose.msra.mxu0 0.0
        %554 = vmatprep.subr.mxu0 0.0
        %555 = vmatpush2.xpose.msra.mxu0 0.0
        %556 = vmatprep.subr.mxu0 0.0
        %557 = vmatpush2.xpose.msra.mxu0 0.0
        %558 = vmatprep.subr.mxu0 0.0
        %559 = vmatpush2.xpose.msra.mxu0 0.0
        %560 = vmatprep.subr.mxu0 0.0
        %561 = vmatpush2.xpose.msra.mxu0 0.0
        %562 = vmatprep.mubr.f32.mxu0 0.0
        %563 = vmatmul.mubr.f32.gmra.mxu0 %v493
        %v564 = vpop.f32.mrf.mxu0
        %v565 = vadd.f32 0.0, %v564
        %v566 = vpop.f32.mrf.mxu0
        %567 = vdwg.mxu0
        %v569 = vsel %vm491, %v480, 0
        %v572 = vsel %vm491, %v484, 0
        %574 = vmatprep.subr.mxu0 0.0
        %575 = vmatpush1.xpose.msra.mxu0 0.0
        %576 = vmatprep.subr.mxu0 0.0
        %577 = vmatpush1.xpose.msra.mxu0 0.0
        %578 = vmatprep.subr.mxu0 0.0
        %579 = vmatpush1.xpose.msra.mxu0 0.0
        %580 = vmatprep.subr.mxu0 0.0
        %581 = vmatpush1.xpose.msra.mxu0 0.0
        %582 = vmatprep.subr.mxu0 0.0
        %583 = vmatpush1.xpose.msra.mxu0 0.0
        %584 = vmatprep.subr.mxu0 0.0
        %585 = vmatpush1.xpose.msra.mxu0 0.0
        %586 = vmatprep.subr.mxu0 0.0
        %587 = vmatpush1.xpose.msra.mxu0 0.0
        %588 = vmatprep.subr.mxu0 0.0
        %589 = vmatpush1.xpose.msra.mxu0 0.0
        %590 = vmatprep.subr.mxu0 0.0
        %591 = vmatpush1.xpose.msra.mxu0 0.0
        %592 = vmatprep.subr.mxu0 0.0
        %593 = vmatpush1.xpose.msra.mxu0 0.0
        %594 = vmatprep.subr.mxu0 0.0
        %595 = vmatpush1.xpose.msra.mxu0 0.0
        %596 = vmatprep.subr.mxu0 0.0
        %597 = vmatpush1.xpose.msra.mxu0 0.0
        %598 = vmatprep.subr.mxu0 0.0
        %599 = vmatpush1.xpose.msra.mxu0 0.0
        %600 = vmatprep.subr.mxu0 0.0
        %601 = vmatpush1.xpose.msra.mxu0 0.0
        %602 = vmatprep.subr.mxu0 0.0
        %603 = vmatpush1.xpose.msra.mxu0 0.0
        %604 = vmatprep.subr.mxu0 0.0
        %605 = vmatpush1.xpose.msra.mxu0 %v572
        %606 = vmatprep.subr.mxu0 0.0
        %607 = vmatpush2.xpose.msra.mxu0 0.0
        %608 = vmatprep.subr.mxu0 0.0
        %609 = vmatpush2.xpose.msra.mxu0 0.0
        %610 = vmatprep.subr.mxu0 0.0
        %611 = vmatpush2.xpose.msra.mxu0 0.0
        %612 = vmatprep.subr.mxu0 0.0
        %613 = vmatpush2.xpose.msra.mxu0 0.0
        %614 = vmatprep.subr.mxu0 0.0
        %615 = vmatpush2.xpose.msra.mxu0 0.0
        %616 = vmatprep.subr.mxu0 0.0
        %617 = vmatpush2.xpose.msra.mxu0 0.0
        %618 = vmatprep.subr.mxu0 0.0
        %619 = vmatpush2.xpose.msra.mxu0 0.0
        %620 = vmatprep.subr.mxu0 0.0
        %621 = vmatpush2.xpose.msra.mxu0 0.0
        %622 = vmatprep.subr.mxu0 0.0
        %623 = vmatpush2.xpose.msra.mxu0 0.0
        %624 = vmatprep.subr.mxu0 0.0
        %625 = vmatpush2.xpose.msra.mxu0 0.0
        %626 = vmatprep.subr.mxu0 0.0
        %627 = vmatpush2.xpose.msra.mxu0 0.0
        %628 = vmatprep.subr.mxu0 0.0
        %629 = vmatpush2.xpose.msra.mxu0 0.0
        %630 = vmatprep.subr.mxu0 0.0
        %631 = vmatpush2.xpose.msra.mxu0 0.0
        %632 = vmatprep.subr.mxu0 0.0
        %633 = vmatpush2.xpose.msra.mxu0 0.0
        %634 = vmatprep.subr.mxu0 0.0
        %635 = vmatpush2.xpose.msra.mxu0 0.0
        %636 = vmatprep.subr.mxu0 0.0
        %637 = vmatpush2.xpose.msra.mxu0 0.0
        %638 = vmatprep.mubr.f32.mxu0 0.0
        %639 = vmatmul.mubr.f32.gmra.mxu0 %v569
        %v640 = vpop.f32.mrf.mxu0
        %v641 = vadd.f32 0.0, %v640
        %v642 = vpop.f32.mrf.mxu0
        %643 = vdwg.mxu0
        %v645 = vsel %vm491, %v481, 0
        %v648 = vsel %vm491, %v485, 0
        %650 = vmatprep.subr.mxu0 0.0
        %651 = vmatpush1.xpose.msra.mxu0 0.0
        %652 = vmatprep.subr.mxu0 0.0
        %653 = vmatpush1.xpose.msra.mxu0 0.0
        %654 = vmatprep.subr.mxu0 0.0
        %655 = vmatpush1.xpose.msra.mxu0 0.0
        %656 = vmatprep.subr.mxu0 0.0
        %657 = vmatpush1.xpose.msra.mxu0 0.0
        %658 = vmatprep.subr.mxu0 0.0
        %659 = vmatpush1.xpose.msra.mxu0 0.0
        %660 = vmatprep.subr.mxu0 0.0
        %661 = vmatpush1.xpose.msra.mxu0 0.0
        %662 = vmatprep.subr.mxu0 0.0
        %663 = vmatpush1.xpose.msra.mxu0 0.0
        %664 = vmatprep.subr.mxu0 0.0
        %665 = vmatpush1.xpose.msra.mxu0 0.0
        %666 = vmatprep.subr.mxu0 0.0
        %667 = vmatpush1.xpose.msra.mxu0 0.0
        %668 = vmatprep.subr.mxu0 0.0
        %669 = vmatpush1.xpose.msra.mxu0 0.0
        %670 = vmatprep.subr.mxu0 0.0
        %671 = vmatpush1.xpose.msra.mxu0 0.0
        %672 = vmatprep.subr.mxu0 0.0
        %673 = vmatpush1.xpose.msra.mxu0 0.0
        %674 = vmatprep.subr.mxu0 0.0
        %675 = vmatpush1.xpose.msra.mxu0 0.0
        %676 = vmatprep.subr.mxu0 0.0
        %677 = vmatpush1.xpose.msra.mxu0 0.0
        %678 = vmatprep.subr.mxu0 0.0
        %679 = vmatpush1.xpose.msra.mxu0 0.0
        %680 = vmatprep.subr.mxu0 0.0
        %681 = vmatpush1.xpose.msra.mxu0 %v648
        %682 = vmatprep.subr.mxu0 0.0
        %683 = vmatpush2.xpose.msra.mxu0 0.0
        %684 = vmatprep.subr.mxu0 0.0
        %685 = vmatpush2.xpose.msra.mxu0 0.0
        %686 = vmatprep.subr.mxu0 0.0
        %687 = vmatpush2.xpose.msra.mxu0 0.0
        %688 = vmatprep.subr.mxu0 0.0
        %689 = vmatpush2.xpose.msra.mxu0 0.0
        %690 = vmatprep.subr.mxu0 0.0
        %691 = vmatpush2.xpose.msra.mxu0 0.0
        %692 = vmatprep.subr.mxu0 0.0
        %693 = vmatpush2.xpose.msra.mxu0 0.0
        %694 = vmatprep.subr.mxu0 0.0
        %695 = vmatpush2.xpose.msra.mxu0 0.0
        %696 = vmatprep.subr.mxu0 0.0
        %697 = vmatpush2.xpose.msra.mxu0 0.0
        %698 = vmatprep.subr.mxu0 0.0
        %699 = vmatpush2.xpose.msra.mxu0 0.0
        %700 = vmatprep.subr.mxu0 0.0
        %701 = vmatpush2.xpose.msra.mxu0 0.0
        %702 = vmatprep.subr.mxu0 0.0
        %703 = vmatpush2.xpose.msra.mxu0 0.0
        %704 = vmatprep.subr.mxu0 0.0
        %705 = vmatpush2.xpose.msra.mxu0 0.0
        %706 = vmatprep.subr.mxu0 0.0
        %707 = vmatpush2.xpose.msra.mxu0 0.0
        %708 = vmatprep.subr.mxu0 0.0
        %709 = vmatpush2.xpose.msra.mxu0 0.0
        %710 = vmatprep.subr.mxu0 0.0
        %711 = vmatpush2.xpose.msra.mxu0 0.0
        %712 = vmatprep.subr.mxu0 0.0
        %713 = vmatpush2.xpose.msra.mxu0 0.0
        %714 = vmatprep.mubr.f32.mxu0 0.0
        %715 = vmatmul.mubr.f32.gmra.mxu0 %v645
        %v716 = vpop.f32.mrf.mxu0
        %v717 = vadd.f32 0.0, %v716
        %v718 = vpop.f32.mrf.mxu0
        %719 = vdwg.mxu0
        %v721 = vsel %vm491, %v482, 0
        %v724 = vsel %vm491, %v486, 0
        %726 = vmatprep.subr.mxu0 0.0
        %727 = vmatpush1.xpose.msra.mxu0 0.0
        %728 = vmatprep.subr.mxu0 0.0
        %729 = vmatpush1.xpose.msra.mxu0 0.0
        %730 = vmatprep.subr.mxu0 0.0
        %731 = vmatpush1.xpose.msra.mxu0 0.0
        %732 = vmatprep.subr.mxu0 0.0
        %733 = vmatpush1.xpose.msra.mxu0 0.0
        %734 = vmatprep.subr.mxu0 0.0
        %735 = vmatpush1.xpose.msra.mxu0 0.0
        %736 = vmatprep.subr.mxu0 0.0
        %737 = vmatpush1.xpose.msra.mxu0 0.0
        %738 = vmatprep.subr.mxu0 0.0
        %739 = vmatpush1.xpose.msra.mxu0 0.0
        %740 = vmatprep.subr.mxu0 0.0
        %741 = vmatpush1.xpose.msra.mxu0 0.0
        %742 = vmatprep.subr.mxu0 0.0
        %743 = vmatpush1.xpose.msra.mxu0 0.0
        %744 = vmatprep.subr.mxu0 0.0
        %745 = vmatpush1.xpose.msra.mxu0 0.0
        %746 = vmatprep.subr.mxu0 0.0
        %747 = vmatpush1.xpose.msra.mxu0 0.0
        %748 = vmatprep.subr.mxu0 0.0
        %749 = vmatpush1.xpose.msra.mxu0 0.0
        %750 = vmatprep.subr.mxu0 0.0
        %751 = vmatpush1.xpose.msra.mxu0 0.0
        %752 = vmatprep.subr.mxu0 0.0
        %753 = vmatpush1.xpose.msra.mxu0 0.0
        %754 = vmatprep.subr.mxu0 0.0
        %755 = vmatpush1.xpose.msra.mxu0 0.0
        %756 = vmatprep.subr.mxu0 0.0
        %757 = vmatpush1.xpose.msra.mxu0 %v724
        %758 = vmatprep.subr.mxu0 0.0
        %759 = vmatpush2.xpose.msra.mxu0 0.0
        %760 = vmatprep.subr.mxu0 0.0
        %761 = vmatpush2.xpose.msra.mxu0 0.0
        %762 = vmatprep.subr.mxu0 0.0
        %763 = vmatpush2.xpose.msra.mxu0 0.0
        %764 = vmatprep.subr.mxu0 0.0
        %765 = vmatpush2.xpose.msra.mxu0 0.0
        %766 = vmatprep.subr.mxu0 0.0
        %767 = vmatpush2.xpose.msra.mxu0 0.0
        %768 = vmatprep.subr.mxu0 0.0
        %769 = vmatpush2.xpose.msra.mxu0 0.0
        %770 = vmatprep.subr.mxu0 0.0
        %771 = vmatpush2.xpose.msra.mxu0 0.0
        %772 = vmatprep.subr.mxu0 0.0
        %773 = vmatpush2.xpose.msra.mxu0 0.0
        %774 = vmatprep.subr.mxu0 0.0
        %775 = vmatpush2.xpose.msra.mxu0 0.0
        %776 = vmatprep.subr.mxu0 0.0
        %777 = vmatpush2.xpose.msra.mxu0 0.0
        %778 = vmatprep.subr.mxu0 0.0
        %779 = vmatpush2.xpose.msra.mxu0 0.0
        %780 = vmatprep.subr.mxu0 0.0
        %781 = vmatpush2.xpose.msra.mxu0 0.0
        %782 = vmatprep.subr.mxu0 0.0
        %783 = vmatpush2.xpose.msra.mxu0 0.0
        %784 = vmatprep.subr.mxu0 0.0
        %785 = vmatpush2.xpose.msra.mxu0 0.0
        %786 = vmatprep.subr.mxu0 0.0
        %787 = vmatpush2.xpose.msra.mxu0 0.0
        %788 = vmatprep.subr.mxu0 0.0
        %789 = vmatpush2.xpose.msra.mxu0 0.0
        %790 = vmatprep.mubr.f32.mxu0 0.0
        %791 = vmatmul.mubr.f32.gmra.mxu0 %v721
        %v792 = vpop.f32.mrf.mxu0
        %v793 = vadd.f32 0.0, %v792
        %v794 = vpop.f32.mrf.mxu0
        %795 = vdwg.mxu0
        %p796 = scmp.lt.s32.totalorder %s460, %s459
        // Predicated region
        $region65: #{tpu_custom_call.1} parent=47 // pred_check
          %p797 = pneg %p796
        $region66: #{tpu_custom_call.1} parent=47 // pred_check_branch
          %799 = sbr.rel (%p797) target = $region68
        $region67: #{tpu_custom_call.1} parent=47 // pred_region
          %v800 = vld [vmem:[#allocation2] sm:$0xff]
          %v801 = vld [vmem:[#allocation2 + $0x8] sm:$0xff]
          %v802 = vld [vmem:[#allocation2 + $0x10] sm:$0xff]
          %v803 = vld [vmem:[#allocation2 + $0x18] sm:$0xff]
          %v804 = vsel %vm491, %v565, -inf
          %805 = vmax.xlane.f32.xlu0 %v804
          %v806 = vpop.xlane.xlu0 %805
          %v807 = vsel %vm491, %v641, -inf
          %808 = vmax.xlane.f32.xlu0 %v807
          %v809 = vpop.xlane.xlu0 %808
          %v810 = vsel %vm491, %v717, -inf
          %811 = vmax.xlane.f32.xlu0 %v810
          %v812 = vpop.xlane.xlu0 %811
          %v813 = vsel %vm491, %v793, -inf
          %814 = vmax.xlane.f32.xlu0 %v813
          %v815 = vpop.xlane.xlu0 %814
          %v816 = vmax.f32 %v800, %v806
          %v817 = vmax.f32 %v801, %v809
          %v818 = vmax.f32 %v802, %v812
          %v819 = vmax.f32 %v803, %v815
          %v820 = vsub.f32 %v800, %v816
          %v821 = vsub.f32 %v801, %v817
          %v822 = vsub.f32 %v802, %v818
          %v823 = vsub.f32 %v803, %v819
          %v824 = vmul.f32 %v820, 1.442695
          %v825 = vpow.pop %v824
          %v826 = vmul.f32 %v821, 1.442695
          %v827 = vpow.pop %v826
          %v828 = vmul.f32 %v822, 1.442695
          %v829 = vpow.pop %v828
          %v830 = vmul.f32 %v823, 1.442695
          %v831 = vpow.pop %v830
          %833 = vset.pattern.permute.xlu0 0
          %834 = vperm.xlu0 %833, %v816
          %v835 = vpop.permute.xlu0 %834
          %838 = vset.pattern.permute.xlu0 0
          %839 = vperm.xlu0 %838, %v817
          %v840 = vpop.permute.xlu0 %839
          %843 = vset.pattern.permute.xlu0 0
          %844 = vperm.xlu0 %843, %v818
          %v845 = vpop.permute.xlu0 %844
          %848 = vset.pattern.permute.xlu0 0
          %849 = vperm.xlu0 %848, %v819
          %v850 = vpop.permute.xlu0 %849
          %v852 = vsub.f32 %v565, %v835
          %v853 = vsub.f32 %v641, %v840
          %v854 = vsub.f32 %v717, %v845
          %v855 = vsub.f32 %v793, %v850
          %v856 = vmul.f32 %v852, 1.442695
          %v857 = vpow.pop %v856
          %v858 = vmul.f32 %v853, 1.442695
          %v859 = vpow.pop %v858
          %v860 = vmul.f32 %v854, 1.442695
          %v861 = vpow.pop %v860
          %v862 = vmul.f32 %v855, 1.442695
          %v863 = vpow.pop %v862
          %v864 = vld [vmem:[#allocation3] sm:$0xff]
          %v865 = vld [vmem:[#allocation3 + $0x8] sm:$0xff]
          %v866 = vld [vmem:[#allocation3 + $0x10] sm:$0xff]
          %v867 = vld [vmem:[#allocation3 + $0x18] sm:$0xff]
          %v868 = vmul.f32 %v825, %v864
          %v869 = vmul.f32 %v827, %v865
          %v870 = vmul.f32 %v829, %v866
          %v871 = vmul.f32 %v831, %v867
          %v872 = vsel %vm491, %v857, 0.0
          %873 = vadd.xlane.f32.xlu0 %v872
          %v874 = vpop.xlane.xlu0 %873
          %v875 = vsel %vm491, %v859, 0.0
          %876 = vadd.xlane.f32.xlu0 %v875
          %v877 = vpop.xlane.xlu0 %876
          %v878 = vsel %vm491, %v861, 0.0
          %879 = vadd.xlane.f32.xlu0 %v878
          %v880 = vpop.xlane.xlu0 %879
          %v881 = vsel %vm491, %v863, 0.0
          %882 = vadd.xlane.f32.xlu0 %v881
          %v883 = vpop.xlane.xlu0 %882
          %v884 = vadd.f32 %v868, %v874
          %v885 = vadd.f32 %v869, %v877
          %v886 = vadd.f32 %v870, %v880
          %v887 = vadd.f32 %v871, %v883
          %vm888 = vcmask 7168
          %889 = vst.msk [vmem:[#allocation3] sm:$0xff] %vm888, %v884
          %890 = vst.msk [vmem:[#allocation3 + $0x8] sm:$0xff] %vm888, %v885
          %891 = vst.msk [vmem:[#allocation3 + $0x10] sm:$0xff] %vm888, %v886
          %892 = vst.msk [vmem:[#allocation3 + $0x18] sm:$0xff] %vm888, %v887
          %v893 = vld [vmem:[#allocation4] sm:$0xff]
          %v894 = vld [vmem:[#allocation4 + $0x8] sm:$0xff]
          %v895 = vld [vmem:[#allocation4 + $0x10] sm:$0xff]
          %v896 = vld [vmem:[#allocation4 + $0x18] sm:$0xff]
          %898 = vset.pattern.permute.xlu0 0
          %899 = vperm.xlu0 %898, %v825
          %v900 = vpop.permute.xlu0 %899
          %903 = vset.pattern.permute.xlu0 0
          %904 = vperm.xlu0 %903, %v827
          %v905 = vpop.permute.xlu0 %904
          %908 = vset.pattern.permute.xlu0 0
          %909 = vperm.xlu0 %908, %v829
          %v910 = vpop.permute.xlu0 %909
          %913 = vset.pattern.permute.xlu0 0
          %914 = vperm.xlu0 %913, %v831
          %v915 = vpop.permute.xlu0 %914
          %v917 = vmul.f32 %v900, %v893
          %v918 = vmul.f32 %v905, %v894
          %v919 = vmul.f32 %v910, %v895
          %v920 = vmul.f32 %v915, %v896
          %v922 = vsel %vm491, %v857, 0
          %924 = vmatprep.subr.mxu0 0.0
          %925 = vmatpush1.msra.mxu0 0.0
          %926 = vmatprep.subr.mxu0 0.0
          %927 = vmatpush1.msra.mxu0 0.0
          %928 = vmatprep.subr.mxu0 0.0
          %929 = vmatpush1.msra.mxu0 0.0
          %930 = vmatprep.subr.mxu0 0.0
          %931 = vmatpush1.msra.mxu0 0.0
          %932 = vmatprep.subr.mxu0 0.0
          %933 = vmatpush1.msra.mxu0 0.0
          %934 = vmatprep.subr.mxu0 0.0
          %935 = vmatpush1.msra.mxu0 0.0
          %936 = vmatprep.subr.mxu0 0.0
          %937 = vmatpush1.msra.mxu0 0.0
          %938 = vmatprep.subr.mxu0 0.0
          %939 = vmatpush1.msra.mxu0 0.0
          %940 = vmatprep.subr.mxu0 0.0
          %941 = vmatpush1.msra.mxu0 0.0
          %942 = vmatprep.subr.mxu0 0.0
          %943 = vmatpush1.msra.mxu0 0.0
          %944 = vmatprep.subr.mxu0 0.0
          %945 = vmatpush1.msra.mxu0 0.0
          %946 = vmatprep.subr.mxu0 0.0
          %947 = vmatpush1.msra.mxu0 0.0
          %948 = vmatprep.subr.mxu0 0.0
          %949 = vmatpush1.msra.mxu0 0.0
          %950 = vmatprep.subr.mxu0 0.0
          %951 = vmatpush1.msra.mxu0 0.0
          %952 = vmatprep.subr.mxu0 0.0
          %953 = vmatpush1.msra.mxu0 0.0
          %954 = vmatprep.subr.mxu0 0.0
          %955 = vmatpush1.msra.mxu0 %v487
          %956 = vmatprep.subr.mxu0 0.0
          %957 = vmatpush2.msra.mxu0 0.0
          %958 = vmatprep.subr.mxu0 0.0
          %959 = vmatpush2.msra.mxu0 0.0
          %960 = vmatprep.subr.mxu0 0.0
          %961 = vmatpush2.msra.mxu0 0.0
          %962 = vmatprep.subr.mxu0 0.0
          %963 = vmatpush2.msra.mxu0 0.0
          %964 = vmatprep.subr.mxu0 0.0
          %965 = vmatpush2.msra.mxu0 0.0
          %966 = vmatprep.subr.mxu0 0.0
          %967 = vmatpush2.msra.mxu0 0.0
          %968 = vmatprep.subr.mxu0 0.0
          %969 = vmatpush2.msra.mxu0 0.0
          %970 = vmatprep.subr.mxu0 0.0
          %971 = vmatpush2.msra.mxu0 0.0
          %972 = vmatprep.subr.mxu0 0.0
          %973 = vmatpush2.msra.mxu0 0.0
          %974 = vmatprep.subr.mxu0 0.0
          %975 = vmatpush2.msra.mxu0 0.0
          %976 = vmatprep.subr.mxu0 0.0
          %977 = vmatpush2.msra.mxu0 0.0
          %978 = vmatprep.subr.mxu0 0.0
          %979 = vmatpush2.msra.mxu0 0.0
          %980 = vmatprep.subr.mxu0 0.0
          %981 = vmatpush2.msra.mxu0 0.0
          %982 = vmatprep.subr.mxu0 0.0
          %983 = vmatpush2.msra.mxu0 0.0
          %984 = vmatprep.subr.mxu0 0.0
          %985 = vmatpush2.msra.mxu0 0.0
          %986 = vmatprep.subr.mxu0 0.0
          %987 = vmatpush2.msra.mxu0 0.0
          %988 = vmatprep.mubr.f32.mxu0 0.0
          %989 = vmatmul.mubr.f32.gmra.mxu0 %v922
          %v990 = vpop.f32.mrf.mxu0
          %v991 = vadd.f32 0.0, %v990
          %v992 = vpop.f32.mrf.mxu0
          %993 = vdwg.mxu0
          %v995 = vsel %vm491, %v859, 0
          %997 = vmatprep.subr.mxu0 0.0
          %998 = vmatpush1.msra.mxu0 0.0
          %999 = vmatprep.subr.mxu0 0.0
          %1000 = vmatpush1.msra.mxu0 0.0
          %1001 = vmatprep.subr.mxu0 0.0
          %1002 = vmatpush1.msra.mxu0 0.0
          %1003 = vmatprep.subr.mxu0 0.0
          %1004 = vmatpush1.msra.mxu0 0.0
          %1005 = vmatprep.subr.mxu0 0.0
          %1006 = vmatpush1.msra.mxu0 0.0
          %1007 = vmatprep.subr.mxu0 0.0
          %1008 = vmatpush1.msra.mxu0 0.0
          %1009 = vmatprep.subr.mxu0 0.0
          %1010 = vmatpush1.msra.mxu0 0.0
          %1011 = vmatprep.subr.mxu0 0.0
          %1012 = vmatpush1.msra.mxu0 0.0
          %1013 = vmatprep.subr.mxu0 0.0
          %1014 = vmatpush1.msra.mxu0 0.0
          %1015 = vmatprep.subr.mxu0 0.0
          %1016 = vmatpush1.msra.mxu0 0.0
          %1017 = vmatprep.subr.mxu0 0.0
          %1018 = vmatpush1.msra.mxu0 0.0
          %1019 = vmatprep.subr.mxu0 0.0
          %1020 = vmatpush1.msra.mxu0 0.0
          %1021 = vmatprep.subr.mxu0 0.0
          %1022 = vmatpush1.msra.mxu0 0.0
          %1023 = vmatprep.subr.mxu0 0.0
          %1024 = vmatpush1.msra.mxu0 0.0
          %1025 = vmatprep.subr.mxu0 0.0
          %1026 = vmatpush1.msra.mxu0 0.0
          %1027 = vmatprep.subr.mxu0 0.0
          %1028 = vmatpush1.msra.mxu0 %v488
          %1029 = vmatprep.subr.mxu0 0.0
          %1030 = vmatpush2.msra.mxu0 0.0
          %1031 = vmatprep.subr.mxu0 0.0
          %1032 = vmatpush2.msra.mxu0 0.0
          %1033 = vmatprep.subr.mxu0 0.0
          %1034 = vmatpush2.msra.mxu0 0.0
          %1035 = vmatprep.subr.mxu0 0.0
          %1036 = vmatpush2.msra.mxu0 0.0
          %1037 = vmatprep.subr.mxu0 0.0
          %1038 = vmatpush2.msra.mxu0 0.0
          %1039 = vmatprep.subr.mxu0 0.0
          %1040 = vmatpush2.msra.mxu0 0.0
          %1041 = vmatprep.subr.mxu0 0.0
          %1042 = vmatpush2.msra.mxu0 0.0
          %1043 = vmatprep.subr.mxu0 0.0
          %1044 = vmatpush2.msra.mxu0 0.0
          %1045 = vmatprep.subr.mxu0 0.0
          %1046 = vmatpush2.msra.mxu0 0.0
          %1047 = vmatprep.subr.mxu0 0.0
          %1048 = vmatpush2.msra.mxu0 0.0
          %1049 = vmatprep.subr.mxu0 0.0
          %1050 = vmatpush2.msra.mxu0 0.0
          %1051 = vmatprep.subr.mxu0 0.0
          %1052 = vmatpush2.msra.mxu0 0.0
          %1053 = vmatprep.subr.mxu0 0.0
          %1054 = vmatpush2.msra.mxu0 0.0
          %1055 = vmatprep.subr.mxu0 0.0
          %1056 = vmatpush2.msra.mxu0 0.0
          %1057 = vmatprep.subr.mxu0 0.0
          %1058 = vmatpush2.msra.mxu0 0.0
          %1059 = vmatprep.subr.mxu0 0.0
          %1060 = vmatpush2.msra.mxu0 0.0
          %1061 = vmatprep.mubr.f32.mxu0 0.0
          %1062 = vmatmul.mubr.f32.gmra.mxu0 %v995
          %v1063 = vpop.f32.mrf.mxu0
          %v1064 = vadd.f32 0.0, %v1063
          %v1065 = vpop.f32.mrf.mxu0
          %1066 = vdwg.mxu0
          %v1068 = vsel %vm491, %v861, 0
          %1070 = vmatprep.subr.mxu0 0.0
          %1071 = vmatpush1.msra.mxu0 0.0
          %1072 = vmatprep.subr.mxu0 0.0
          %1073 = vmatpush1.msra.mxu0 0.0
          %1074 = vmatprep.subr.mxu0 0.0
          %1075 = vmatpush1.msra.mxu0 0.0
          %1076 = vmatprep.subr.mxu0 0.0
          %1077 = vmatpush1.msra.mxu0 0.0
          %1078 = vmatprep.subr.mxu0 0.0
          %1079 = vmatpush1.msra.mxu0 0.0
          %1080 = vmatprep.subr.mxu0 0.0
          %1081 = vmatpush1.msra.mxu0 0.0
          %1082 = vmatprep.subr.mxu0 0.0
          %1083 = vmatpush1.msra.mxu0 0.0
          %1084 = vmatprep.subr.mxu0 0.0
          %1085 = vmatpush1.msra.mxu0 0.0
          %1086 = vmatprep.subr.mxu0 0.0
          %1087 = vmatpush1.msra.mxu0 0.0
          %1088 = vmatprep.subr.mxu0 0.0
          %1089 = vmatpush1.msra.mxu0 0.0
          %1090 = vmatprep.subr.mxu0 0.0
          %1091 = vmatpush1.msra.mxu0 0.0
          %1092 = vmatprep.subr.mxu0 0.0
          %1093 = vmatpush1.msra.mxu0 0.0
          %1094 = vmatprep.subr.mxu0 0.0
          %1095 = vmatpush1.msra.mxu0 0.0
          %1096 = vmatprep.subr.mxu0 0.0
          %1097 = vmatpush1.msra.mxu0 0.0
          %1098 = vmatprep.subr.mxu0 0.0
          %1099 = vmatpush1.msra.mxu0 0.0
          %1100 = vmatprep.subr.mxu0 0.0
          %1101 = vmatpush1.msra.mxu0 %v489
          %1102 = vmatprep.subr.mxu0 0.0
          %1103 = vmatpush2.msra.mxu0 0.0
          %1104 = vmatprep.subr.mxu0 0.0
          %1105 = vmatpush2.msra.mxu0 0.0
          %1106 = vmatprep.subr.mxu0 0.0
          %1107 = vmatpush2.msra.mxu0 0.0
          %1108 = vmatprep.subr.mxu0 0.0
          %1109 = vmatpush2.msra.mxu0 0.0
          %1110 = vmatprep.subr.mxu0 0.0
          %1111 = vmatpush2.msra.mxu0 0.0
          %1112 = vmatprep.subr.mxu0 0.0
          %1113 = vmatpush2.msra.mxu0 0.0
          %1114 = vmatprep.subr.mxu0 0.0
          %1115 = vmatpush2.msra.mxu0 0.0
          %1116 = vmatprep.subr.mxu0 0.0
          %1117 = vmatpush2.msra.mxu0 0.0
          %1118 = vmatprep.subr.mxu0 0.0
          %1119 = vmatpush2.msra.mxu0 0.0
          %1120 = vmatprep.subr.mxu0 0.0
          %1121 = vmatpush2.msra.mxu0 0.0
          %1122 = vmatprep.subr.mxu0 0.0
          %1123 = vmatpush2.msra.mxu0 0.0
          %1124 = vmatprep.subr.mxu0 0.0
          %1125 = vmatpush2.msra.mxu0 0.0
          %1126 = vmatprep.subr.mxu0 0.0
          %1127 = vmatpush2.msra.mxu0 0.0
          %1128 = vmatprep.subr.mxu0 0.0
          %1129 = vmatpush2.msra.mxu0 0.0
          %1130 = vmatprep.subr.mxu0 0.0
          %1131 = vmatpush2.msra.mxu0 0.0
          %1132 = vmatprep.subr.mxu0 0.0
          %1133 = vmatpush2.msra.mxu0 0.0
          %1134 = vmatprep.mubr.f32.mxu0 0.0
          %1135 = vmatmul.mubr.f32.gmra.mxu0 %v1068
          %v1136 = vpop.f32.mrf.mxu0
          %v1137 = vadd.f32 0.0, %v1136
          %v1138 = vpop.f32.mrf.mxu0
          %1139 = vdwg.mxu0
          %v1141 = vsel %vm491, %v863, 0
          %1143 = vmatprep.subr.mxu0 0.0
          %1144 = vmatpush1.msra.mxu0 0.0
          %1145 = vmatprep.subr.mxu0 0.0
          %1146 = vmatpush1.msra.mxu0 0.0
          %1147 = vmatprep.subr.mxu0 0.0
          %1148 = vmatpush1.msra.mxu0 0.0
          %1149 = vmatprep.subr.mxu0 0.0
          %1150 = vmatpush1.msra.mxu0 0.0
          %1151 = vmatprep.subr.mxu0 0.0
          %1152 = vmatpush1.msra.mxu0 0.0
          %1153 = vmatprep.subr.mxu0 0.0
          %1154 = vmatpush1.msra.mxu0 0.0
          %1155 = vmatprep.subr.mxu0 0.0
          %1156 = vmatpush1.msra.mxu0 0.0
          %1157 = vmatprep.subr.mxu0 0.0
          %1158 = vmatpush1.msra.mxu0 0.0
          %1159 = vmatprep.subr.mxu0 0.0
          %1160 = vmatpush1.msra.mxu0 0.0
          %1161 = vmatprep.subr.mxu0 0.0
          %1162 = vmatpush1.msra.mxu0 0.0
          %1163 = vmatprep.subr.mxu0 0.0
          %1164 = vmatpush1.msra.mxu0 0.0
          %1165 = vmatprep.subr.mxu0 0.0
          %1166 = vmatpush1.msra.mxu0 0.0
          %1167 = vmatprep.subr.mxu0 0.0
          %1168 = vmatpush1.msra.mxu0 0.0
          %1169 = vmatprep.subr.mxu0 0.0
          %1170 = vmatpush1.msra.mxu0 0.0
          %1171 = vmatprep.subr.mxu0 0.0
          %1172 = vmatpush1.msra.mxu0 0.0
          %1173 = vmatprep.subr.mxu0 0.0
          %1174 = vmatpush1.msra.mxu0 %v490
          %1175 = vmatprep.subr.mxu0 0.0
          %1176 = vmatpush2.msra.mxu0 0.0
          %1177 = vmatprep.subr.mxu0 0.0
          %1178 = vmatpush2.msra.mxu0 0.0
          %1179 = vmatprep.subr.mxu0 0.0
          %1180 = vmatpush2.msra.mxu0 0.0
          %1181 = vmatprep.subr.mxu0 0.0
          %1182 = vmatpush2.msra.mxu0 0.0
          %1183 = vmatprep.subr.mxu0 0.0
          %1184 = vmatpush2.msra.mxu0 0.0
          %1185 = vmatprep.subr.mxu0 0.0
          %1186 = vmatpush2.msra.mxu0 0.0
          %1187 = vmatprep.subr.mxu0 0.0
          %1188 = vmatpush2.msra.mxu0 0.0
          %1189 = vmatprep.subr.mxu0 0.0
          %1190 = vmatpush2.msra.mxu0 0.0
          %1191 = vmatprep.subr.mxu0 0.0
          %1192 = vmatpush2.msra.mxu0 0.0
          %1193 = vmatprep.subr.mxu0 0.0
          %1194 = vmatpush2.msra.mxu0 0.0
          %1195 = vmatprep.subr.mxu0 0.0
          %1196 = vmatpush2.msra.mxu0 0.0
          %1197 = vmatprep.subr.mxu0 0.0
          %1198 = vmatpush2.msra.mxu0 0.0
          %1199 = vmatprep.subr.mxu0 0.0
          %1200 = vmatpush2.msra.mxu0 0.0
          %1201 = vmatprep.subr.mxu0 0.0
          %1202 = vmatpush2.msra.mxu0 0.0
          %1203 = vmatprep.subr.mxu0 0.0
          %1204 = vmatpush2.msra.mxu0 0.0
          %1205 = vmatprep.subr.mxu0 0.0
          %1206 = vmatpush2.msra.mxu0 0.0
          %1207 = vmatprep.mubr.f32.mxu0 0.0
          %1208 = vmatmul.mubr.f32.gmra.mxu0 %v1141
          %v1209 = vpop.f32.mrf.mxu0
          %v1210 = vadd.f32 0.0, %v1209
          %v1211 = vpop.f32.mrf.mxu0
          %1212 = vdwg.mxu0
          %v1213 = vadd.f32 %v917, %v991
          %v1214 = vadd.f32 %v918, %v1064
          %v1215 = vadd.f32 %v919, %v1137
          %v1216 = vadd.f32 %v920, %v1210
          %1217 = vst.msk [vmem:[#allocation4] sm:$0xff] %vm491, %v1213
          %1218 = vst.msk [vmem:[#allocation4 + $0x8] sm:$0xff] %vm491, %v1214
          %1219 = vst.msk [vmem:[#allocation4 + $0x10] sm:$0xff] %vm491, %v1215
          %1220 = vst.msk [vmem:[#allocation4 + $0x18] sm:$0xff] %vm491, %v1216
          %1221 = vst.msk [vmem:[#allocation2] sm:$0xff] %vm888, %v816
          %1222 = vst.msk [vmem:[#allocation2 + $0x8] sm:$0xff] %vm888, %v817
          %1223 = vst.msk [vmem:[#allocation2 + $0x10] sm:$0xff] %vm888, %v818
          %1224 = vst.msk [vmem:[#allocation2 + $0x18] sm:$0xff] %vm888, %v819
        $region68: #{tpu_custom_call.1} parent=47 // pred_fallthru
          _
        %p1225 = scmp.eq.s32.totalorder %s460, %s459
        // Predicated region
        $region69: #{tpu_custom_call.1} parent=47 // pred_check
          %p1226 = pneg %p1225
        $region70: #{tpu_custom_call.1} parent=47 // pred_check_branch
          %1228 = sbr.rel (%p1226) target = $region72
        $region71: #{tpu_custom_call.1} parent=47 // pred_region
          %v1229 = vlaneseq
          %v1230 = vshrl.u32 %v1229, 7
          %v1231 = vlaneseq
          %v1232 = vand.u32 %v1231, 127
          %vm1233 = vcmp.ge.s32.totalorder %v1230, %v1232
          %v1234 = vsel %vm1233, 1, 0
          %vm1235 = vcmp.eq.s32.totalorder %v1234, 1
          %v1236 = vsel %vm1235, %v565, -1e+30
          %v1237 = vsel %vm1235, %v641, -1e+30
          %v1238 = vsel %vm1235, %v717, -1e+30
          %v1239 = vsel %vm1235, %v793, -1e+30
          %v1240 = vld [vmem:[#allocation2] sm:$0xff]
          %v1241 = vld [vmem:[#allocation2 + $0x8] sm:$0xff]
          %v1242 = vld [vmem:[#allocation2 + $0x10] sm:$0xff]
          %v1243 = vld [vmem:[#allocation2 + $0x18] sm:$0xff]
          %v1244 = vsel %vm491, %v1236, -inf
          %1245 = vmax.xlane.f32.xlu0 %v1244
          %v1246 = vpop.xlane.xlu0 %1245
          %v1247 = vsel %vm491, %v1237, -inf
          %1248 = vmax.xlane.f32.xlu0 %v1247
          %v1249 = vpop.xlane.xlu0 %1248
          %v1250 = vsel %vm491, %v1238, -inf
          %1251 = vmax.xlane.f32.xlu0 %v1250
          %v1252 = vpop.xlane.xlu0 %1251
          %v1253 = vsel %vm491, %v1239, -inf
          %1254 = vmax.xlane.f32.xlu0 %v1253
          %v1255 = vpop.xlane.xlu0 %1254
          %v1256 = vmax.f32 %v1240, %v1246
          %v1257 = vmax.f32 %v1241, %v1249
          %v1258 = vmax.f32 %v1242, %v1252
          %v1259 = vmax.f32 %v1243, %v1255
          %v1260 = vsub.f32 %v1240, %v1256
          %v1261 = vsub.f32 %v1241, %v1257
          %v1262 = vsub.f32 %v1242, %v1258
          %v1263 = vsub.f32 %v1243, %v1259
          %v1264 = vmul.f32 %v1260, 1.442695
          %v1265 = vpow.pop %v1264
          %v1266 = vmul.f32 %v1261, 1.442695
          %v1267 = vpow.pop %v1266
          %v1268 = vmul.f32 %v1262, 1.442695
          %v1269 = vpow.pop %v1268
          %v1270 = vmul.f32 %v1263, 1.442695
          %v1271 = vpow.pop %v1270
          %1273 = vset.pattern.permute.xlu0 0
          %1274 = vperm.xlu0 %1273, %v1256
          %v1275 = vpop.permute.xlu0 %1274
          %1278 = vset.pattern.permute.xlu0 0
          %1279 = vperm.xlu0 %1278, %v1257
          %v1280 = vpop.permute.xlu0 %1279
          %1283 = vset.pattern.permute.xlu0 0
          %1284 = vperm.xlu0 %1283, %v1258
          %v1285 = vpop.permute.xlu0 %1284
          %1288 = vset.pattern.permute.xlu0 0
          %1289 = vperm.xlu0 %1288, %v1259
          %v1290 = vpop.permute.xlu0 %1289
          %v1292 = vsub.f32 %v1236, %v1275
          %v1293 = vsub.f32 %v1237, %v1280
          %v1294 = vsub.f32 %v1238, %v1285
          %v1295 = vsub.f32 %v1239, %v1290
          %v1296 = vmul.f32 %v1292, 1.442695
          %v1297 = vpow.pop %v1296
          %v1298 = vmul.f32 %v1293, 1.442695
          %v1299 = vpow.pop %v1298
          %v1300 = vmul.f32 %v1294, 1.442695
          %v1301 = vpow.pop %v1300
          %v1302 = vmul.f32 %v1295, 1.442695
          %v1303 = vpow.pop %v1302
          %v1304 = vld [vmem:[#allocation3] sm:$0xff]
          %v1305 = vld [vmem:[#allocation3 + $0x8] sm:$0xff]
          %v1306 = vld [vmem:[#allocation3 + $0x10] sm:$0xff]
          %v1307 = vld [vmem:[#allocation3 + $0x18] sm:$0xff]
          %v1308 = vmul.f32 %v1265, %v1304
          %v1309 = vmul.f32 %v1267, %v1305
          %v1310 = vmul.f32 %v1269, %v1306
          %v1311 = vmul.f32 %v1271, %v1307
          %v1312 = vsel %vm491, %v1297, 0.0
          %1313 = vadd.xlane.f32.xlu0 %v1312
          %v1314 = vpop.xlane.xlu0 %1313
          %v1315 = vsel %vm491, %v1299, 0.0
          %1316 = vadd.xlane.f32.xlu0 %v1315
          %v1317 = vpop.xlane.xlu0 %1316
          %v1318 = vsel %vm491, %v1301, 0.0
          %1319 = vadd.xlane.f32.xlu0 %v1318
          %v1320 = vpop.xlane.xlu0 %1319
          %v1321 = vsel %vm491, %v1303, 0.0
          %1322 = vadd.xlane.f32.xlu0 %v1321
          %v1323 = vpop.xlane.xlu0 %1322
          %v1324 = vadd.f32 %v1308, %v1314
          %v1325 = vadd.f32 %v1309, %v1317
          %v1326 = vadd.f32 %v1310, %v1320
          %v1327 = vadd.f32 %v1311, %v1323
          %vm1328 = vcmask 7168
          %1329 = vst.msk [vmem:[#allocation3] sm:$0xff] %vm1328, %v1324
          %1330 = vst.msk [vmem:[#allocation3 + $0x8] sm:$0xff] %vm1328, %v1325
          %1331 = vst.msk [vmem:[#allocation3 + $0x10] sm:$0xff] %vm1328, %v1326
          %1332 = vst.msk [vmem:[#allocation3 + $0x18] sm:$0xff] %vm1328, %v1327
          %v1333 = vld [vmem:[#allocation4] sm:$0xff]
          %v1334 = vld [vmem:[#allocation4 + $0x8] sm:$0xff]
          %v1335 = vld [vmem:[#allocation4 + $0x10] sm:$0xff]
          %v1336 = vld [vmem:[#allocation4 + $0x18] sm:$0xff]
          %1338 = vset.pattern.permute.xlu0 0
          %1339 = vperm.xlu0 %1338, %v1265
          %v1340 = vpop.permute.xlu0 %1339
          %1343 = vset.pattern.permute.xlu0 0
          %1344 = vperm.xlu0 %1343, %v1267
          %v1345 = vpop.permute.xlu0 %1344
          %1348 = vset.pattern.permute.xlu0 0
          %1349 = vperm.xlu0 %1348, %v1269
          %v1350 = vpop.permute.xlu0 %1349
          %1353 = vset.pattern.permute.xlu0 0
          %1354 = vperm.xlu0 %1353, %v1271
          %v1355 = vpop.permute.xlu0 %1354
          %v1357 = vmul.f32 %v1340, %v1333
          %v1358 = vmul.f32 %v1345, %v1334
          %v1359 = vmul.f32 %v1350, %v1335
          %v1360 = vmul.f32 %v1355, %v1336
          %v1362 = vsel %vm491, %v1297, 0
          %1364 = vmatprep.subr.mxu0 0.0
          %1365 = vmatpush1.msra.mxu0 0.0
          %1366 = vmatprep.subr.mxu0 0.0
          %1367 = vmatpush1.msra.mxu0 0.0
          %1368 = vmatprep.subr.mxu0 0.0
          %1369 = vmatpush1.msra.mxu0 0.0
          %1370 = vmatprep.subr.mxu0 0.0
          %1371 = vmatpush1.msra.mxu0 0.0
          %1372 = vmatprep.subr.mxu0 0.0
          %1373 = vmatpush1.msra.mxu0 0.0
          %1374 = vmatprep.subr.mxu0 0.0
          %1375 = vmatpush1.msra.mxu0 0.0
          %1376 = vmatprep.subr.mxu0 0.0
          %1377 = vmatpush1.msra.mxu0 0.0
          %1378 = vmatprep.subr.mxu0 0.0
          %1379 = vmatpush1.msra.mxu0 0.0
          %1380 = vmatprep.subr.mxu0 0.0
          %1381 = vmatpush1.msra.mxu0 0.0
          %1382 = vmatprep.subr.mxu0 0.0
          %1383 = vmatpush1.msra.mxu0 0.0
          %1384 = vmatprep.subr.mxu0 0.0
          %1385 = vmatpush1.msra.mxu0 0.0
          %1386 = vmatprep.subr.mxu0 0.0
          %1387 = vmatpush1.msra.mxu0 0.0
          %1388 = vmatprep.subr.mxu0 0.0
          %1389 = vmatpush1.msra.mxu0 0.0
          %1390 = vmatprep.subr.mxu0 0.0
          %1391 = vmatpush1.msra.mxu0 0.0
          %1392 = vmatprep.subr.mxu0 0.0
          %1393 = vmatpush1.msra.mxu0 0.0
          %1394 = vmatprep.subr.mxu0 0.0
          %1395 = vmatpush1.msra.mxu0 %v487
          %1396 = vmatprep.subr.mxu0 0.0
          %1397 = vmatpush2.msra.mxu0 0.0
          %1398 = vmatprep.subr.mxu0 0.0
          %1399 = vmatpush2.msra.mxu0 0.0
          %1400 = vmatprep.subr.mxu0 0.0
          %1401 = vmatpush2.msra.mxu0 0.0
          %1402 = vmatprep.subr.mxu0 0.0
          %1403 = vmatpush2.msra.mxu0 0.0
          %1404 = vmatprep.subr.mxu0 0.0
          %1405 = vmatpush2.msra.mxu0 0.0
          %1406 = vmatprep.subr.mxu0 0.0
          %1407 = vmatpush2.msra.mxu0 0.0
          %1408 = vmatprep.subr.mxu0 0.0
          %1409 = vmatpush2.msra.mxu0 0.0
          %1410 = vmatprep.subr.mxu0 0.0
          %1411 = vmatpush2.msra.mxu0 0.0
          %1412 = vmatprep.subr.mxu0 0.0
          %1413 = vmatpush2.msra.mxu0 0.0
          %1414 = vmatprep.subr.mxu0 0.0
          %1415 = vmatpush2.msra.mxu0 0.0
          %1416 = vmatprep.subr.mxu0 0.0
          %1417 = vmatpush2.msra.mxu0 0.0
          %1418 = vmatprep.subr.mxu0 0.0
          %1419 = vmatpush2.msra.mxu0 0.0
          %1420 = vmatprep.subr.mxu0 0.0
          %1421 = vmatpush2.msra.mxu0 0.0
          %1422 = vmatprep.subr.mxu0 0.0
          %1423 = vmatpush2.msra.mxu0 0.0
          %1424 = vmatprep.subr.mxu0 0.0
          %1425 = vmatpush2.msra.mxu0 0.0
          %1426 = vmatprep.subr.mxu0 0.0
          %1427 = vmatpush2.msra.mxu0 0.0
          %1428 = vmatprep.mubr.f32.mxu0 0.0
          %1429 = vmatmul.mubr.f32.gmra.mxu0 %v1362
          %v1430 = vpop.f32.mrf.mxu0
          %v1431 = vadd.f32 0.0, %v1430
          %v1432 = vpop.f32.mrf.mxu0
          %1433 = vdwg.mxu0
          %v1435 = vsel %vm491, %v1299, 0
          %1437 = vmatprep.subr.mxu0 0.0
          %1438 = vmatpush1.msra.mxu0 0.0
          %1439 = vmatprep.subr.mxu0 0.0
          %1440 = vmatpush1.msra.mxu0 0.0
          %1441 = vmatprep.subr.mxu0 0.0
          %1442 = vmatpush1.msra.mxu0 0.0
          %1443 = vmatprep.subr.mxu0 0.0
          %1444 = vmatpush1.msra.mxu0 0.0
          %1445 = vmatprep.subr.mxu0 0.0
          %1446 = vmatpush1.msra.mxu0 0.0
          %1447 = vmatprep.subr.mxu0 0.0
          %1448 = vmatpush1.msra.mxu0 0.0
          %1449 = vmatprep.subr.mxu0 0.0
          %1450 = vmatpush1.msra.mxu0 0.0
          %1451 = vmatprep.subr.mxu0 0.0
          %1452 = vmatpush1.msra.mxu0 0.0
          %1453 = vmatprep.subr.mxu0 0.0
          %1454 = vmatpush1.msra.mxu0 0.0
          %1455 = vmatprep.subr.mxu0 0.0
          %1456 = vmatpush1.msra.mxu0 0.0
          %1457 = vmatprep.subr.mxu0 0.0
          %1458 = vmatpush1.msra.mxu0 0.0
          %1459 = vmatprep.subr.mxu0 0.0
          %1460 = vmatpush1.msra.mxu0 0.0
          %1461 = vmatprep.subr.mxu0 0.0
          %1462 = vmatpush1.msra.mxu0 0.0
          %1463 = vmatprep.subr.mxu0 0.0
          %1464 = vmatpush1.msra.mxu0 0.0
          %1465 = vmatprep.subr.mxu0 0.0
          %1466 = vmatpush1.msra.mxu0 0.0
          %1467 = vmatprep.subr.mxu0 0.0
          %1468 = vmatpush1.msra.mxu0 %v488
          %1469 = vmatprep.subr.mxu0 0.0
          %1470 = vmatpush2.msra.mxu0 0.0
          %1471 = vmatprep.subr.mxu0 0.0
          %1472 = vmatpush2.msra.mxu0 0.0
          %1473 = vmatprep.subr.mxu0 0.0
          %1474 = vmatpush2.msra.mxu0 0.0
          %1475 = vmatprep.subr.mxu0 0.0
          %1476 = vmatpush2.msra.mxu0 0.0
          %1477 = vmatprep.subr.mxu0 0.0
          %1478 = vmatpush2.msra.mxu0 0.0
          %1479 = vmatprep.subr.mxu0 0.0
          %1480 = vmatpush2.msra.mxu0 0.0
          %1481 = vmatprep.subr.mxu0 0.0
          %1482 = vmatpush2.msra.mxu0 0.0
          %1483 = vmatprep.subr.mxu0 0.0
          %1484 = vmatpush2.msra.mxu0 0.0
          %1485 = vmatprep.subr.mxu0 0.0
          %1486 = vmatpush2.msra.mxu0 0.0
          %1487 = vmatprep.subr.mxu0 0.0
          %1488 = vmatpush2.msra.mxu0 0.0
          %1489 = vmatprep.subr.mxu0 0.0
          %1490 = vmatpush2.msra.mxu0 0.0
          %1491 = vmatprep.subr.mxu0 0.0
          %1492 = vmatpush2.msra.mxu0 0.0
          %1493 = vmatprep.subr.mxu0 0.0
          %1494 = vmatpush2.msra.mxu0 0.0
          %1495 = vmatprep.subr.mxu0 0.0
          %1496 = vmatpush2.msra.mxu0 0.0
          %1497 = vmatprep.subr.mxu0 0.0
          %1498 = vmatpush2.msra.mxu0 0.0
          %1499 = vmatprep.subr.mxu0 0.0
          %1500 = vmatpush2.msra.mxu0 0.0
          %1501 = vmatprep.mubr.f32.mxu0 0.0
          %1502 = vmatmul.mubr.f32.gmra.mxu0 %v1435
          %v1503 = vpop.f32.mrf.mxu0
          %v1504 = vadd.f32 0.0, %v1503
          %v1505 = vpop.f32.mrf.mxu0
          %1506 = vdwg.mxu0
          %v1508 = vsel %vm491, %v1301, 0
          %1510 = vmatprep.subr.mxu0 0.0
          %1511 = vmatpush1.msra.mxu0 0.0
          %1512 = vmatprep.subr.mxu0 0.0
          %1513 = vmatpush1.msra.mxu0 0.0
          %1514 = vmatprep.subr.mxu0 0.0
          %1515 = vmatpush1.msra.mxu0 0.0
          %1516 = vmatprep.subr.mxu0 0.0
          %1517 = vmatpush1.msra.mxu0 0.0
          %1518 = vmatprep.subr.mxu0 0.0
          %1519 = vmatpush1.msra.mxu0 0.0
          %1520 = vmatprep.subr.mxu0 0.0
          %1521 = vmatpush1.msra.mxu0 0.0
          %1522 = vmatprep.subr.mxu0 0.0
          %1523 = vmatpush1.msra.mxu0 0.0
          %1524 = vmatprep.subr.mxu0 0.0
          %1525 = vmatpush1.msra.mxu0 0.0
          %1526 = vmatprep.subr.mxu0 0.0
          %1527 = vmatpush1.msra.mxu0 0.0
          %1528 = vmatprep.subr.mxu0 0.0
          %1529 = vmatpush1.msra.mxu0 0.0
          %1530 = vmatprep.subr.mxu0 0.0
          %1531 = vmatpush1.msra.mxu0 0.0
          %1532 = vmatprep.subr.mxu0 0.0
          %1533 = vmatpush1.msra.mxu0 0.0
          %1534 = vmatprep.subr.mxu0 0.0
          %1535 = vmatpush1.msra.mxu0 0.0
          %1536 = vmatprep.subr.mxu0 0.0
          %1537 = vmatpush1.msra.mxu0 0.0
          %1538 = vmatprep.subr.mxu0 0.0
          %1539 = vmatpush1.msra.mxu0 0.0
          %1540 = vmatprep.subr.mxu0 0.0
          %1541 = vmatpush1.msra.mxu0 %v489
          %1542 = vmatprep.subr.mxu0 0.0
          %1543 = vmatpush2.msra.mxu0 0.0
          %1544 = vmatprep.subr.mxu0 0.0
          %1545 = vmatpush2.msra.mxu0 0.0
          %1546 = vmatprep.subr.mxu0 0.0
          %1547 = vmatpush2.msra.mxu0 0.0
          %1548 = vmatprep.subr.mxu0 0.0
          %1549 = vmatpush2.msra.mxu0 0.0
          %1550 = vmatprep.subr.mxu0 0.0
          %1551 = vmatpush2.msra.mxu0 0.0
          %1552 = vmatprep.subr.mxu0 0.0
          %1553 = vmatpush2.msra.mxu0 0.0
          %1554 = vmatprep.subr.mxu0 0.0
          %1555 = vmatpush2.msra.mxu0 0.0
          %1556 = vmatprep.subr.mxu0 0.0
          %1557 = vmatpush2.msra.mxu0 0.0
          %1558 = vmatprep.subr.mxu0 0.0
          %1559 = vmatpush2.msra.mxu0 0.0
          %1560 = vmatprep.subr.mxu0 0.0
          %1561 = vmatpush2.msra.mxu0 0.0
          %1562 = vmatprep.subr.mxu0 0.0
          %1563 = vmatpush2.msra.mxu0 0.0
          %1564 = vmatprep.subr.mxu0 0.0
          %1565 = vmatpush2.msra.mxu0 0.0
          %1566 = vmatprep.subr.mxu0 0.0
          %1567 = vmatpush2.msra.mxu0 0.0
          %1568 = vmatprep.subr.mxu0 0.0
          %1569 = vmatpush2.msra.mxu0 0.0
          %1570 = vmatprep.subr.mxu0 0.0
          %1571 = vmatpush2.msra.mxu0 0.0
          %1572 = vmatprep.subr.mxu0 0.0
          %1573 = vmatpush2.msra.mxu0 0.0
          %1574 = vmatprep.mubr.f32.mxu0 0.0
          %1575 = vmatmul.mubr.f32.gmra.mxu0 %v1508
          %v1576 = vpop.f32.mrf.mxu0
          %v1577 = vadd.f32 0.0, %v1576
          %v1578 = vpop.f32.mrf.mxu0
          %1579 = vdwg.mxu0
          %v1581 = vsel %vm491, %v1303, 0
          %1583 = vmatprep.subr.mxu0 0.0
          %1584 = vmatpush1.msra.mxu0 0.0
          %1585 = vmatprep.subr.mxu0 0.0
          %1586 = vmatpush1.msra.mxu0 0.0
          %1587 = vmatprep.subr.mxu0 0.0
          %1588 = vmatpush1.msra.mxu0 0.0
          %1589 = vmatprep.subr.mxu0 0.0
          %1590 = vmatpush1.msra.mxu0 0.0
          %1591 = vmatprep.subr.mxu0 0.0
          %1592 = vmatpush1.msra.mxu0 0.0
          %1593 = vmatprep.subr.mxu0 0.0
          %1594 = vmatpush1.msra.mxu0 0.0
          %1595 = vmatprep.subr.mxu0 0.0
          %1596 = vmatpush1.msra.mxu0 0.0
          %1597 = vmatprep.subr.mxu0 0.0
          %1598 = vmatpush1.msra.mxu0 0.0
          %1599 = vmatprep.subr.mxu0 0.0
          %1600 = vmatpush1.msra.mxu0 0.0
          %1601 = vmatprep.subr.mxu0 0.0
          %1602 = vmatpush1.msra.mxu0 0.0
          %1603 = vmatprep.subr.mxu0 0.0
          %1604 = vmatpush1.msra.mxu0 0.0
          %1605 = vmatprep.subr.mxu0 0.0
          %1606 = vmatpush1.msra.mxu0 0.0
          %1607 = vmatprep.subr.mxu0 0.0
          %1608 = vmatpush1.msra.mxu0 0.0
          %1609 = vmatprep.subr.mxu0 0.0
          %1610 = vmatpush1.msra.mxu0 0.0
          %1611 = vmatprep.subr.mxu0 0.0
          %1612 = vmatpush1.msra.mxu0 0.0
          %1613 = vmatprep.subr.mxu0 0.0
          %1614 = vmatpush1.msra.mxu0 %v490
          %1615 = vmatprep.subr.mxu0 0.0
          %1616 = vmatpush2.msra.mxu0 0.0
          %1617 = vmatprep.subr.mxu0 0.0
          %1618 = vmatpush2.msra.mxu0 0.0
          %1619 = vmatprep.subr.mxu0 0.0
          %1620 = vmatpush2.msra.mxu0 0.0
          %1621 = vmatprep.subr.mxu0 0.0
          %1622 = vmatpush2.msra.mxu0 0.0
          %1623 = vmatprep.subr.mxu0 0.0
          %1624 = vmatpush2.msra.mxu0 0.0
          %1625 = vmatprep.subr.mxu0 0.0
          %1626 = vmatpush2.msra.mxu0 0.0
          %1627 = vmatprep.subr.mxu0 0.0
          %1628 = vmatpush2.msra.mxu0 0.0
          %1629 = vmatprep.subr.mxu0 0.0
          %1630 = vmatpush2.msra.mxu0 0.0
          %1631 = vmatprep.subr.mxu0 0.0
          %1632 = vmatpush2.msra.mxu0 0.0
          %1633 = vmatprep.subr.mxu0 0.0
          %1634 = vmatpush2.msra.mxu0 0.0
          %1635 = vmatprep.subr.mxu0 0.0
          %1636 = vmatpush2.msra.mxu0 0.0
          %1637 = vmatprep.subr.mxu0 0.0
          %1638 = vmatpush2.msra.mxu0 0.0
          %1639 = vmatprep.subr.mxu0 0.0
          %1640 = vmatpush2.msra.mxu0 0.0
          %1641 = vmatprep.subr.mxu0 0.0
          %1642 = vmatpush2.msra.mxu0 0.0
          %1643 = vmatprep.subr.mxu0 0.0
          %1644 = vmatpush2.msra.mxu0 0.0
          %1645 = vmatprep.subr.mxu0 0.0
          %1646 = vmatpush2.msra.mxu0 0.0
          %1647 = vmatprep.mubr.f32.mxu0 0.0
          %1648 = vmatmul.mubr.f32.gmra.mxu0 %v1581
          %v1649 = vpop.f32.mrf.mxu0
          %v1650 = vadd.f32 0.0, %v1649
          %v1651 = vpop.f32.mrf.mxu0
          %1652 = vdwg.mxu0
          %v1653 = vadd.f32 %v1357, %v1431
          %v1654 = vadd.f32 %v1358, %v1504
          %v1655 = vadd.f32 %v1359, %v1577
          %v1656 = vadd.f32 %v1360, %v1650
          %1657 = vst.msk [vmem:[#allocation4] sm:$0xff] %vm491, %v1653
          %1658 = vst.msk [vmem:[#allocation4 + $0x8] sm:$0xff] %vm491, %v1654
          %1659 = vst.msk [vmem:[#allocation4 + $0x10] sm:$0xff] %vm491, %v1655
          %1660 = vst.msk [vmem:[#allocation4 + $0x18] sm:$0xff] %vm491, %v1656
          %1661 = vst.msk [vmem:[#allocation2] sm:$0xff] %vm1328, %v1256
          %1662 = vst.msk [vmem:[#allocation2 + $0x8] sm:$0xff] %vm1328, %v1257
          %1663 = vst.msk [vmem:[#allocation2 + $0x10] sm:$0xff] %vm1328, %v1258
          %1664 = vst.msk [vmem:[#allocation2 + $0x18] sm:$0xff] %vm1328, %v1259
          %v1665 = vld [vmem:[#allocation4] sm:$0xff]
          %v1666 = vld [vmem:[#allocation4 + $0x8] sm:$0xff]
          %v1667 = vld [vmem:[#allocation4 + $0x10] sm:$0xff]
          %v1668 = vld [vmem:[#allocation4 + $0x18] sm:$0xff]
          %v1669 = vld [vmem:[#allocation3] sm:$0xff]
          %v1670 = vld [vmem:[#allocation3 + $0x8] sm:$0xff]
          %v1671 = vld [vmem:[#allocation3 + $0x10] sm:$0xff]
          %v1672 = vld [vmem:[#allocation3 + $0x18] sm:$0xff]
          %v1673 = vrcp.pop %v1669
          %v1674 = vrcp.pop %v1670
          %v1675 = vrcp.pop %v1671
          %v1676 = vrcp.pop %v1672
          %1678 = vset.pattern.permute.xlu0 0
          %1679 = vperm.xlu0 %1678, %v1673
          %v1680 = vpop.permute.xlu0 %1679
          %1683 = vset.pattern.permute.xlu0 0
          %1684 = vperm.xlu0 %1683, %v1674
          %v1685 = vpop.permute.xlu0 %1684
          %1688 = vset.pattern.permute.xlu0 0
          %1689 = vperm.xlu0 %1688, %v1675
          %v1690 = vpop.permute.xlu0 %1689
          %1693 = vset.pattern.permute.xlu0 0
          %1694 = vperm.xlu0 %1693, %v1676
          %v1695 = vpop.permute.xlu0 %1694
          %v1697 = vmul.f32 %v1665, %v1680
          %v1698 = vmul.f32 %v1666, %v1685
          %v1699 = vmul.f32 %v1667, %v1690
          %v1700 = vmul.f32 %v1668, %v1695
          %v1701 = vld [vmem:[%s6] sm:$0xff]
          %s1702 = scalar_lea.vmem %s6, 8
          %v1703 = vld [vmem:[%s1702] sm:$0xff]
          %v1705 = vsel %vm491, %v1698, 0
          %1707 = vmatprep.subr.mxu0 0.0
          %1708 = vmatpush1.msra.mxu0 0.0
          %1709 = vmatprep.subr.mxu0 0.0
          %1710 = vmatpush1.msra.mxu0 0.0
          %1711 = vmatprep.subr.mxu0 0.0
          %1712 = vmatpush1.msra.mxu0 0.0
          %1713 = vmatprep.subr.mxu0 0.0
          %1714 = vmatpush1.msra.mxu0 0.0
          %1715 = vmatprep.subr.mxu0 0.0
          %1716 = vmatpush1.msra.mxu0 0.0
          %1717 = vmatprep.subr.mxu0 0.0
          %1718 = vmatpush1.msra.mxu0 0.0
          %1719 = vmatprep.subr.mxu0 0.0
          %1720 = vmatpush1.msra.mxu0 0.0
          %1721 = vmatprep.subr.mxu0 0.0
          %1722 = vmatpush1.msra.mxu0 0.0
          %1723 = vmatprep.subr.mxu0 0.0
          %1724 = vmatpush1.msra.mxu0 0.0
          %1725 = vmatprep.subr.mxu0 0.0
          %1726 = vmatpush1.msra.mxu0 0.0
          %1727 = vmatprep.subr.mxu0 0.0
          %1728 = vmatpush1.msra.mxu0 0.0
          %1729 = vmatprep.subr.mxu0 0.0
          %1730 = vmatpush1.msra.mxu0 0.0
          %1731 = vmatprep.subr.mxu0 0.0
          %1732 = vmatpush1.msra.mxu0 0.0
          %1733 = vmatprep.subr.mxu0 0.0
          %1734 = vmatpush1.msra.mxu0 0.0
          %1735 = vmatprep.subr.mxu0 0.0
          %1736 = vmatpush1.msra.mxu0 0.0
          %1737 = vmatprep.subr.mxu0 0.0
          %1738 = vmatpush1.msra.mxu0 %v1703
          %1739 = vmatprep.subr.mxu0 0.0
          %1740 = vmatpush2.msra.mxu0 0.0
          %1741 = vmatprep.subr.mxu0 0.0
          %1742 = vmatpush2.msra.mxu0 0.0
          %1743 = vmatprep.subr.mxu0 0.0
          %1744 = vmatpush2.msra.mxu0 0.0
          %1745 = vmatprep.subr.mxu0 0.0
          %1746 = vmatpush2.msra.mxu0 0.0
          %1747 = vmatprep.subr.mxu0 0.0
          %1748 = vmatpush2.msra.mxu0 0.0
          %1749 = vmatprep.subr.mxu0 0.0
          %1750 = vmatpush2.msra.mxu0 0.0
          %1751 = vmatprep.subr.mxu0 0.0
          %1752 = vmatpush2.msra.mxu0 0.0
          %1753 = vmatprep.subr.mxu0 0.0
          %1754 = vmatpush2.msra.mxu0 0.0
          %1755 = vmatprep.subr.mxu0 0.0
          %1756 = vmatpush2.msra.mxu0 0.0
          %1757 = vmatprep.subr.mxu0 0.0
          %1758 = vmatpush2.msra.mxu0 0.0
          %1759 = vmatprep.subr.mxu0 0.0
          %1760 = vmatpush2.msra.mxu0 0.0
          %1761 = vmatprep.subr.mxu0 0.0
          %1762 = vmatpush2.msra.mxu0 0.0
          %1763 = vmatprep.subr.mxu0 0.0
          %1764 = vmatpush2.msra.mxu0 0.0
          %1765 = vmatprep.subr.mxu0 0.0
          %1766 = vmatpush2.msra.mxu0 0.0
          %1767 = vmatprep.subr.mxu0 0.0
          %1768 = vmatpush2.msra.mxu0 0.0
          %1769 = vmatprep.subr.mxu0 0.0
          %1770 = vmatpush2.msra.mxu0 0.0
          %1771 = vmatprep.mubr.f32.mxu0 0.0
          %1772 = vmatmul.mubr.f32.gmra.mxu0 %v1705
          %v1773 = vpop.f32.mrf.mxu0
          %v1774 = vadd.f32 0.0, %v1773
          %v1775 = vpop.f32.mrf.mxu0
          %1776 = vdwg.mxu0
          %v1778 = vsel %vm491, %v1697, 0
          %1780 = vmatprep.subr.mxu0 0.0
          %1781 = vmatpush1.msra.mxu0 0.0
          %1782 = vmatprep.subr.mxu0 0.0
          %1783 = vmatpush1.msra.mxu0 0.0
          %1784 = vmatprep.subr.mxu0 0.0
          %1785 = vmatpush1.msra.mxu0 0.0
          %1786 = vmatprep.subr.mxu0 0.0
          %1787 = vmatpush1.msra.mxu0 0.0
          %1788 = vmatprep.subr.mxu0 0.0
          %1789 = vmatpush1.msra.mxu0 0.0
          %1790 = vmatprep.subr.mxu0 0.0
          %1791 = vmatpush1.msra.mxu0 0.0
          %1792 = vmatprep.subr.mxu0 0.0
          %1793 = vmatpush1.msra.mxu0 0.0
          %1794 = vmatprep.subr.mxu0 0.0
          %1795 = vmatpush1.msra.mxu0 0.0
          %1796 = vmatprep.subr.mxu0 0.0
          %1797 = vmatpush1.msra.mxu0 0.0
          %1798 = vmatprep.subr.mxu0 0.0
          %1799 = vmatpush1.msra.mxu0 0.0
          %1800 = vmatprep.subr.mxu0 0.0
          %1801 = vmatpush1.msra.mxu0 0.0
          %1802 = vmatprep.subr.mxu0 0.0
          %1803 = vmatpush1.msra.mxu0 0.0
          %1804 = vmatprep.subr.mxu0 0.0
          %1805 = vmatpush1.msra.mxu0 0.0
          %1806 = vmatprep.subr.mxu0 0.0
          %1807 = vmatpush1.msra.mxu0 0.0
          %1808 = vmatprep.subr.mxu0 0.0
          %1809 = vmatpush1.msra.mxu0 0.0
          %1810 = vmatprep.subr.mxu0 0.0
          %1811 = vmatpush1.msra.mxu0 %v1701
          %1812 = vmatprep.subr.mxu0 0.0
          %1813 = vmatpush2.msra.mxu0 0.0
          %1814 = vmatprep.subr.mxu0 0.0
          %1815 = vmatpush2.msra.mxu0 0.0
          %1816 = vmatprep.subr.mxu0 0.0
          %1817 = vmatpush2.msra.mxu0 0.0
          %1818 = vmatprep.subr.mxu0 0.0
          %1819 = vmatpush2.msra.mxu0 0.0
          %1820 = vmatprep.subr.mxu0 0.0
          %1821 = vmatpush2.msra.mxu0 0.0
          %1822 = vmatprep.subr.mxu0 0.0
          %1823 = vmatpush2.msra.mxu0 0.0
          %1824 = vmatprep.subr.mxu0 0.0
          %1825 = vmatpush2.msra.mxu0 0.0
          %1826 = vmatprep.subr.mxu0 0.0
          %1827 = vmatpush2.msra.mxu0 0.0
          %1828 = vmatprep.subr.mxu0 0.0
          %1829 = vmatpush2.msra.mxu0 0.0
          %1830 = vmatprep.subr.mxu0 0.0
          %1831 = vmatpush2.msra.mxu0 0.0
          %1832 = vmatprep.subr.mxu0 0.0
          %1833 = vmatpush2.msra.mxu0 0.0
          %1834 = vmatprep.subr.mxu0 0.0
          %1835 = vmatpush2.msra.mxu0 0.0
          %1836 = vmatprep.subr.mxu0 0.0
          %1837 = vmatpush2.msra.mxu0 0.0
          %1838 = vmatprep.subr.mxu0 0.0
          %1839 = vmatpush2.msra.mxu0 0.0
          %1840 = vmatprep.subr.mxu0 0.0
          %1841 = vmatpush2.msra.mxu0 0.0
          %1842 = vmatprep.subr.mxu0 0.0
          %1843 = vmatpush2.msra.mxu0 0.0
          %1844 = vmatprep.mubr.f32.mxu0 0.0
          %1845 = vmatmul.mubr.f32.gmra.mxu0 %v1778
          %v1846 = vpop.f32.mrf.mxu0
          %v1847 = vadd.f32 %v1774, %v1846
          %v1848 = vpop.f32.mrf.mxu0
          %1849 = vdwg.mxu0
          %s1850 = scalar_lea.vmem %s6, 16
          %v1851 = vld [vmem:[%s1850] sm:$0xff]
          %v1853 = vsel %vm491, %v1699, 0
          %1855 = vmatprep.subr.mxu0 0.0
          %1856 = vmatpush1.msra.mxu0 0.0
          %1857 = vmatprep.subr.mxu0 0.0
          %1858 = vmatpush1.msra.mxu0 0.0
          %1859 = vmatprep.subr.mxu0 0.0
          %1860 = vmatpush1.msra.mxu0 0.0
          %1861 = vmatprep.subr.mxu0 0.0
          %1862 = vmatpush1.msra.mxu0 0.0
          %1863 = vmatprep.subr.mxu0 0.0
          %1864 = vmatpush1.msra.mxu0 0.0
          %1865 = vmatprep.subr.mxu0 0.0
          %1866 = vmatpush1.msra.mxu0 0.0
          %1867 = vmatprep.subr.mxu0 0.0
          %1868 = vmatpush1.msra.mxu0 0.0
          %1869 = vmatprep.subr.mxu0 0.0
          %1870 = vmatpush1.msra.mxu0 0.0
          %1871 = vmatprep.subr.mxu0 0.0
          %1872 = vmatpush1.msra.mxu0 0.0
          %1873 = vmatprep.subr.mxu0 0.0
          %1874 = vmatpush1.msra.mxu0 0.0
          %1875 = vmatprep.subr.mxu0 0.0
          %1876 = vmatpush1.msra.mxu0 0.0
          %1877 = vmatprep.subr.mxu0 0.0
          %1878 = vmatpush1.msra.mxu0 0.0
          %1879 = vmatprep.subr.mxu0 0.0
          %1880 = vmatpush1.msra.mxu0 0.0
          %1881 = vmatprep.subr.mxu0 0.0
          %1882 = vmatpush1.msra.mxu0 0.0
          %1883 = vmatprep.subr.mxu0 0.0
          %1884 = vmatpush1.msra.mxu0 0.0
          %1885 = vmatprep.subr.mxu0 0.0
          %1886 = vmatpush1.msra.mxu0 %v1851
          %1887 = vmatprep.subr.mxu0 0.0
          %1888 = vmatpush2.msra.mxu0 0.0
          %1889 = vmatprep.subr.mxu0 0.0
          %1890 = vmatpush2.msra.mxu0 0.0
          %1891 = vmatprep.subr.mxu0 0.0
          %1892 = vmatpush2.msra.mxu0 0.0
          %1893 = vmatprep.subr.mxu0 0.0
          %1894 = vmatpush2.msra.mxu0 0.0
          %1895 = vmatprep.subr.mxu0 0.0
          %1896 = vmatpush2.msra.mxu0 0.0
          %1897 = vmatprep.subr.mxu0 0.0
          %1898 = vmatpush2.msra.mxu0 0.0
          %1899 = vmatprep.subr.mxu0 0.0
          %1900 = vmatpush2.msra.mxu0 0.0
          %1901 = vmatprep.subr.mxu0 0.0
          %1902 = vmatpush2.msra.mxu0 0.0
          %1903 = vmatprep.subr.mxu0 0.0
          %1904 = vmatpush2.msra.mxu0 0.0
          %1905 = vmatprep.subr.mxu0 0.0
          %1906 = vmatpush2.msra.mxu0 0.0
          %1907 = vmatprep.subr.mxu0 0.0
          %1908 = vmatpush2.msra.mxu0 0.0
          %1909 = vmatprep.subr.mxu0 0.0
          %1910 = vmatpush2.msra.mxu0 0.0
          %1911 = vmatprep.subr.mxu0 0.0
          %1912 = vmatpush2.msra.mxu0 0.0
          %1913 = vmatprep.subr.mxu0 0.0
          %1914 = vmatpush2.msra.mxu0 0.0
          %1915 = vmatprep.subr.mxu0 0.0
          %1916 = vmatpush2.msra.mxu0 0.0
          %1917 = vmatprep.subr.mxu0 0.0
          %1918 = vmatpush2.msra.mxu0 0.0
          %1919 = vmatprep.mubr.f32.mxu0 0.0
          %1920 = vmatmul.mubr.f32.gmra.mxu0 %v1853
          %v1921 = vpop.f32.mrf.mxu0
          %v1922 = vadd.f32 0.0, %v1921
          %v1923 = vpop.f32.mrf.mxu0
          %1924 = vdwg.mxu0
          %v1925 = vadd.f32 %v1847, %v1922
          %s1926 = scalar_lea.vmem %s6, 24
          %v1927 = vld [vmem:[%s1926] sm:$0xff]
          %v1929 = vsel %vm491, %v1700, 0
          %1931 = vmatprep.subr.mxu0 0.0
          %1932 = vmatpush1.msra.mxu0 0.0
          %1933 = vmatprep.subr.mxu0 0.0
          %1934 = vmatpush1.msra.mxu0 0.0
          %1935 = vmatprep.subr.mxu0 0.0
          %1936 = vmatpush1.msra.mxu0 0.0
          %1937 = vmatprep.subr.mxu0 0.0
          %1938 = vmatpush1.msra.mxu0 0.0
          %1939 = vmatprep.subr.mxu0 0.0
          %1940 = vmatpush1.msra.mxu0 0.0
          %1941 = vmatprep.subr.mxu0 0.0
          %1942 = vmatpush1.msra.mxu0 0.0
          %1943 = vmatprep.subr.mxu0 0.0
          %1944 = vmatpush1.msra.mxu0 0.0
          %1945 = vmatprep.subr.mxu0 0.0
          %1946 = vmatpush1.msra.mxu0 0.0
          %1947 = vmatprep.subr.mxu0 0.0
          %1948 = vmatpush1.msra.mxu0 0.0
          %1949 = vmatprep.subr.mxu0 0.0
          %1950 = vmatpush1.msra.mxu0 0.0
          %1951 = vmatprep.subr.mxu0 0.0
          %1952 = vmatpush1.msra.mxu0 0.0
          %1953 = vmatprep.subr.mxu0 0.0
          %1954 = vmatpush1.msra.mxu0 0.0
          %1955 = vmatprep.subr.mxu0 0.0
          %1956 = vmatpush1.msra.mxu0 0.0
          %1957 = vmatprep.subr.mxu0 0.0
          %1958 = vmatpush1.msra.mxu0 0.0
          %1959 = vmatprep.subr.mxu0 0.0
          %1960 = vmatpush1.msra.mxu0 0.0
          %1961 = vmatprep.subr.mxu0 0.0
          %1962 = vmatpush1.msra.mxu0 %v1927
          %1963 = vmatprep.subr.mxu0 0.0
          %1964 = vmatpush2.msra.mxu0 0.0
          %1965 = vmatprep.subr.mxu0 0.0
          %1966 = vmatpush2.msra.mxu0 0.0
          %1967 = vmatprep.subr.mxu0 0.0
          %1968 = vmatpush2.msra.mxu0 0.0
          %1969 = vmatprep.subr.mxu0 0.0
          %1970 = vmatpush2.msra.mxu0 0.0
          %1971 = vmatprep.subr.mxu0 0.0
          %1972 = vmatpush2.msra.mxu0 0.0
          %1973 = vmatprep.subr.mxu0 0.0
          %1974 = vmatpush2.msra.mxu0 0.0
          %1975 = vmatprep.subr.mxu0 0.0
          %1976 = vmatpush2.msra.mxu0 0.0
          %1977 = vmatprep.subr.mxu0 0.0
          %1978 = vmatpush2.msra.mxu0 0.0
          %1979 = vmatprep.subr.mxu0 0.0
          %1980 = vmatpush2.msra.mxu0 0.0
          %1981 = vmatprep.subr.mxu0 0.0
          %1982 = vmatpush2.msra.mxu0 0.0
          %1983 = vmatprep.subr.mxu0 0.0
          %1984 = vmatpush2.msra.mxu0 0.0
          %1985 = vmatprep.subr.mxu0 0.0
          %1986 = vmatpush2.msra.mxu0 0.0
          %1987 = vmatprep.subr.mxu0 0.0
          %1988 = vmatpush2.msra.mxu0 0.0
          %1989 = vmatprep.subr.mxu0 0.0
          %1990 = vmatpush2.msra.mxu0 0.0
          %1991 = vmatprep.subr.mxu0 0.0
          %1992 = vmatpush2.msra.mxu0 0.0
          %1993 = vmatprep.subr.mxu0 0.0
          %1994 = vmatpush2.msra.mxu0 0.0
          %1995 = vmatprep.mubr.f32.mxu0 0.0
          %1996 = vmatmul.mubr.f32.gmra.mxu0 %v1929
          %v1997 = vpop.f32.mrf.mxu0
          %v1998 = vadd.f32 0.0, %v1997
          %v1999 = vpop.f32.mrf.mxu0
          %2000 = vdwg.mxu0
          %v2001 = vadd.f32 %v1925, %v1998
          %v2002 = vld [vmem:[%s369] sm:$0xff]
          %v2003 = vadd.f32 %v2002, %v2001
          %v2004 = vmul.f32 %v2003, %v2003
          %vm2005 = vcmask 261120
          %v2006 = vsel %vm2005, %v2004, 0.0
          %2007 = vadd.xlane.f32.xlu0 %v2006
          %v2008 = vpop.xlane.xlu0 %2007
          %v2009 = vrcp.pop 32.0
          %v2010 = vmul.f32 %v2008, %v2009
          %v2011 = vadd.f32 %v2010, 1e-05
          %v2012 = vrsqrt.pop %v2011
          %v2013 = vmul.f32 %v2003, %v2012
          %v2014 = vld [vmem:[#allocation13] sm:$0xff]
          %v2015 = vld [vmem:[#allocation13 + $0x8] sm:$0xff]
          %v2016 = vld [vmem:[#allocation13 + $0x10] sm:$0xff]
          %v2017 = vld [vmem:[#allocation13 + $0x18] sm:$0xff]
          %v2019 = vsel %vm2005, %v2013, 0
          %2021 = vmatprep.subr.mxu0 0.0
          %2022 = vmatpush1.msra.mxu0 0.0
          %2023 = vmatprep.subr.mxu0 0.0
          %2024 = vmatpush1.msra.mxu0 0.0
          %2025 = vmatprep.subr.mxu0 0.0
          %2026 = vmatpush1.msra.mxu0 0.0
          %2027 = vmatprep.subr.mxu0 0.0
          %2028 = vmatpush1.msra.mxu0 0.0
          %2029 = vmatprep.subr.mxu0 0.0
          %2030 = vmatpush1.msra.mxu0 0.0
          %2031 = vmatprep.subr.mxu0 0.0
          %2032 = vmatpush1.msra.mxu0 0.0
          %2033 = vmatprep.subr.mxu0 0.0
          %2034 = vmatpush1.msra.mxu0 0.0
          %2035 = vmatprep.subr.mxu0 0.0
          %2036 = vmatpush1.msra.mxu0 0.0
          %2037 = vmatprep.subr.mxu0 0.0
          %2038 = vmatpush1.msra.mxu0 0.0
          %2039 = vmatprep.subr.mxu0 0.0
          %2040 = vmatpush1.msra.mxu0 0.0
          %2041 = vmatprep.subr.mxu0 0.0
          %2042 = vmatpush1.msra.mxu0 0.0
          %2043 = vmatprep.subr.mxu0 0.0
          %2044 = vmatpush1.msra.mxu0 0.0
          %2045 = vmatprep.subr.mxu0 0.0
          %2046 = vmatpush1.msra.mxu0 %v2017
          %2047 = vmatprep.subr.mxu0 0.0
          %2048 = vmatpush1.msra.mxu0 %v2016
          %2049 = vmatprep.subr.mxu0 0.0
          %2050 = vmatpush1.msra.mxu0 %v2015
          %2051 = vmatprep.subr.mxu0 0.0
          %2052 = vmatpush1.msra.mxu0 %v2014
          %2053 = vmatprep.subr.mxu0 0.0
          %2054 = vmatpush2.msra.mxu0 0.0
          %2055 = vmatprep.subr.mxu0 0.0
          %2056 = vmatpush2.msra.mxu0 0.0
          %2057 = vmatprep.subr.mxu0 0.0
          %2058 = vmatpush2.msra.mxu0 0.0
          %2059 = vmatprep.subr.mxu0 0.0
          %2060 = vmatpush2.msra.mxu0 0.0
          %2061 = vmatprep.subr.mxu0 0.0
          %2062 = vmatpush2.msra.mxu0 0.0
          %2063 = vmatprep.subr.mxu0 0.0
          %2064 = vmatpush2.msra.mxu0 0.0
          %2065 = vmatprep.subr.mxu0 0.0
          %2066 = vmatpush2.msra.mxu0 0.0
          %2067 = vmatprep.subr.mxu0 0.0
          %2068 = vmatpush2.msra.mxu0 0.0
          %2069 = vmatprep.subr.mxu0 0.0
          %2070 = vmatpush2.msra.mxu0 0.0
          %2071 = vmatprep.subr.mxu0 0.0
          %2072 = vmatpush2.msra.mxu0 0.0
          %2073 = vmatprep.subr.mxu0 0.0
          %2074 = vmatpush2.msra.mxu0 0.0
          %2075 = vmatprep.subr.mxu0 0.0
          %2076 = vmatpush2.msra.mxu0 0.0
          %2077 = vmatprep.subr.mxu0 0.0
          %2078 = vmatpush2.msra.mxu0 0.0
          %2079 = vmatprep.subr.mxu0 0.0
          %2080 = vmatpush2.msra.mxu0 0.0
          %2081 = vmatprep.subr.mxu0 0.0
          %2082 = vmatpush2.msra.mxu0 0.0
          %2083 = vmatprep.subr.mxu0 0.0
          %2084 = vmatpush2.msra.mxu0 0.0
          %2085 = vmatprep.mubr.f32.mxu0 0.0
          %2086 = vmatmul.mubr.f32.gmra.mxu0 %v2019
          %v2087 = vpop.f32.mrf.mxu0
          %v2088 = vadd.f32 0.0, %v2087
          %v2089 = vpop.f32.mrf.mxu0
          %2090 = vdwg.mxu0
          %v2091 = vld [vmem:[%s8] sm:$0xff]
          %v2092 = vld [vmem:[%s8 + $0x8] sm:$0xff]
          %v2093 = vld [vmem:[%s8 + $0x10] sm:$0xff]
          %v2094 = vld [vmem:[%s8 + $0x18] sm:$0xff]
          %v2095 = vld [vmem:[%s8 + $0x20] sm:$0xff]
          %v2096 = vld [vmem:[%s8 + $0x28] sm:$0xff]
          %v2097 = vld [vmem:[%s8 + $0x30] sm:$0xff]
          %v2098 = vld [vmem:[%s8 + $0x38] sm:$0xff]
          %v2099 = vld [vmem:[%s8 + $0x40] sm:$0xff]
          %v2100 = vld [vmem:[%s8 + $0x48] sm:$0xff]
          %v2101 = vld [vmem:[%s8 + $0x50] sm:$0xff]
          %v2102 = vld [vmem:[%s8 + $0x58] sm:$0xff]
          %v2103 = vld [vmem:[%s8 + $0x60] sm:$0xff]
          %v2104 = vld [vmem:[%s8 + $0x68] sm:$0xff]
          %v2105 = vld [vmem:[%s8 + $0x70] sm:$0xff]
          %v2106 = vld [vmem:[%s8 + $0x78] sm:$0xff]
          %2107 = vmatprep.subr.mxu0 0.0
          %2108 = vmatpush1.msra.mxu0 %v2106
          %2109 = vmatprep.subr.mxu0 0.0
          %2110 = vmatpush1.msra.mxu0 %v2105
          %2111 = vmatprep.subr.mxu0 0.0
          %2112 = vmatpush1.msra.mxu0 %v2104
          %2113 = vmatprep.subr.mxu0 0.0
          %2114 = vmatpush1.msra.mxu0 %v2103
          %2115 = vmatprep.subr.mxu0 0.0
          %2116 = vmatpush1.msra.mxu0 %v2102
          %2117 = vmatprep.subr.mxu0 0.0
          %2118 = vmatpush1.msra.mxu0 %v2101
          %2119 = vmatprep.subr.mxu0 0.0
          %2120 = vmatpush1.msra.mxu0 %v2100
          %2121 = vmatprep.subr.mxu0 0.0
          %2122 = vmatpush1.msra.mxu0 %v2099
          %2123 = vmatprep.subr.mxu0 0.0
          %2124 = vmatpush1.msra.mxu0 %v2098
          %2125 = vmatprep.subr.mxu0 0.0
          %2126 = vmatpush1.msra.mxu0 %v2097
          %2127 = vmatprep.subr.mxu0 0.0
          %2128 = vmatpush1.msra.mxu0 %v2096
          %2129 = vmatprep.subr.mxu0 0.0
          %2130 = vmatpush1.msra.mxu0 %v2095
          %2131 = vmatprep.subr.mxu0 0.0
          %2132 = vmatpush1.msra.mxu0 %v2094
          %2133 = vmatprep.subr.mxu0 0.0
          %2134 = vmatpush1.msra.mxu0 %v2093
          %2135 = vmatprep.subr.mxu0 0.0
          %2136 = vmatpush1.msra.mxu0 %v2092
          %2137 = vmatprep.subr.mxu0 0.0
          %2138 = vmatpush1.msra.mxu0 %v2091
          %2139 = vmatprep.subr.mxu0 0.0
          %2140 = vmatpush2.msra.mxu0 0.0
          %2141 = vmatprep.subr.mxu0 0.0
          %2142 = vmatpush2.msra.mxu0 0.0
          %2143 = vmatprep.subr.mxu0 0.0
          %2144 = vmatpush2.msra.mxu0 0.0
          %2145 = vmatprep.subr.mxu0 0.0
          %2146 = vmatpush2.msra.mxu0 0.0
          %2147 = vmatprep.subr.mxu0 0.0
          %2148 = vmatpush2.msra.mxu0 0.0
          %2149 = vmatprep.subr.mxu0 0.0
          %2150 = vmatpush2.msra.mxu0 0.0
          %2151 = vmatprep.subr.mxu0 0.0
          %2152 = vmatpush2.msra.mxu0 0.0
          %2153 = vmatprep.subr.mxu0 0.0
          %2154 = vmatpush2.msra.mxu0 0.0
          %2155 = vmatprep.subr.mxu0 0.0
          %2156 = vmatpush2.msra.mxu0 0.0
          %2157 = vmatprep.subr.mxu0 0.0
          %2158 = vmatpush2.msra.mxu0 0.0
          %2159 = vmatprep.subr.mxu0 0.0
          %2160 = vmatpush2.msra.mxu0 0.0
          %2161 = vmatprep.subr.mxu0 0.0
          %2162 = vmatpush2.msra.mxu0 0.0
          %2163 = vmatprep.subr.mxu0 0.0
          %2164 = vmatpush2.msra.mxu0 0.0
          %2165 = vmatprep.subr.mxu0 0.0
          %2166 = vmatpush2.msra.mxu0 0.0
          %2167 = vmatprep.subr.mxu0 0.0
          %2168 = vmatpush2.msra.mxu0 0.0
          %2169 = vmatprep.subr.mxu0 0.0
          %2170 = vmatpush2.msra.mxu0 0.0
          %2171 = vmatprep.mubr.f32.mxu0 0.0
          %2172 = vmatmul.mubr.f32.gmra.mxu0 %v2088
          %v2173 = vpop.f32.mrf.mxu0
          %v2174 = vadd.f32 0.0, %v2173
          %v2175 = vpop.f32.mrf.mxu0
          %2176 = vdwg.mxu0
          %v2177 = vxor.u32 %v2174, 2147483648
          %v2178 = vmul.f32 %v2177, 1.442695
          %v2179 = vpow.pop %v2178
          %v2180 = vadd.f32 %v2179, 1.0
          %v2181 = vrcp.pop %v2180
          %v2182 = vmul.f32 1.0, %v2181
          %v2183 = vmul.f32 %v2174, %v2182
          %v2184 = vadd.f32 %v2003, %v2183
          %2185 = vst.msk [vmem:[%s435] sm:$0xff] %vm2005, %v2184
        $region72: #{tpu_custom_call.1} parent=47 // pred_fallthru
          _
        %s2186 = sand.u32 %s238, 1
        %s2187 = scalar_lea.sflag [#allocation10], %s2186
        %s2188 = sand.u32 %s238, 1
        %s2189 = smul.addr %s2188, 8
        %s2190 = scalar_lea.vmem [#allocation14], %s2189
        // Predicated region
        $region73: #{tpu_custom_call.1} parent=47 // pred_check
          %p2191 = pneg %p248
        $region74: #{tpu_custom_call.1} parent=47 // pred_check_branch
          %2193 = sbr.rel (%p2191) target = $region76
        $region75: #{tpu_custom_call.1} parent=47 // pred_region
          %s2194 = sld [smem:[#allocation6 + %s36]]
          %s2196 = ssub.s32 128, 128
          %2197 = vsyncadd %s2187, %s2196
          %s2198 = sadd.s32 %s2194, %s35
          %s2199 = smul.addr %s2198, 128
          %s2200 = scalar_lea.hbm %s9, %s2199
          %s2202 = sshll.u32 %s2190, 4
          %s2203 = int_to_ptr.vmem [resolvable:$true] %s2202
          %2205 = dma.vmem_to_hbm [thread:$0]  %s2203, 128, %s2200, %s2187
        $region76: #{tpu_custom_call.1} parent=47 // pred_fallthru
          _
      $region48: #{tpu_custom_call.1} parent=5 // pred_fallthru
        _
      %p2206 = scmp.le.s32.totalorder 2, %s26
      // Predicated region
      $region77: #{tpu_custom_call.1} parent=5 // pred_check
        %p2207 = pneg %p2206
      $region78: #{tpu_custom_call.1} parent=5 // pred_check_branch
        %2209 = sbr.rel (%p2207) target = $region80
      $region79: #{tpu_custom_call.1} parent=5 // pred_region
        %s2210 = ssub.s32 %s26, 2
        // Predicated region
        $region81: #{tpu_custom_call.1} parent=79 // pred_check
          %p2211 = pneg %p254
        $region82: #{tpu_custom_call.1} parent=79 // pred_check_branch
          %2213 = sbr.rel (%p2211) target = $region84
        $region83: #{tpu_custom_call.1} parent=79 // pred_region
          %s2214 = sand.u32 %s239, 1
          %s2215 = scalar_lea.sflag [#allocation10], %s2214
          %s2216 = sand.u32 %s239, 1
          %s2217 = smul.addr %s2216, 8
          %s2218 = scalar_lea.vmem [#allocation14], %s2217
          %2219 = dma.done %s2215, 128
        $region84: #{tpu_custom_call.1} parent=79 // pred_fallthru
          _
      $region80: #{tpu_custom_call.1} parent=5 // pred_fallthru
        _
    $region6: #{tpu_custom_call.1} parent=1 // loop_footer
      %s30 = sadd.s32 1, %s26
    $region7: #{tpu_custom_call.1} parent=1 // loop_footer_branch
      %25 = sbr.rel target = $region3
    $region8: #{tpu_custom_call.1} parent=1 // loop_exit
      _
    %2220 = vsyncpa [#allocation9], 1
    %s2221 = scalar_lea.sflag [#allocation9], 1
    %2222 = vsyncpa %s2221, 1
    %2223 = vsyncpa [#allocation12], 1
    %s2224 = scalar_lea.sflag [#allocation12], 1
    %2225 = vsyncpa %s2224, 1
    %2226 = vsyncpa [#allocation10], 1
    %s2227 = scalar_lea.sflag [#allocation10], 1
    %2228 = vsyncpa %s2227, 1

</llo_original>
